<compile_context>
chip_gen: v7x
topology: tpu7x:2x2x1
jax: 0.10.0
libtpu: 0.0.40
codegen_flags: <defaults>
</compile_context>

<pallas_src>
import functools

import jax
import jax.numpy as jnp
import numpy as np
from jax.experimental import pallas as pl
from jax.experimental.pallas import tpu as pltpu

INPUT_DIM = 3
LSTM_IN = 6
HIDDEN = 6
NUM_CLASSES = 8


def _tree_sum(terms):
    """Binary-tree sum of a list of same-shaped arrays (shortens the dep chain)."""
    while len(terms) > 1:
        nxt = [terms[i] + terms[i + 1] for i in range(0, len(terms) - 1, 2)]
        if len(terms) % 2:
            nxt.append(terms[-1])
        terms = nxt
    return terms[0]


def toy_lstm_kernel(x_ref, wp_ref, bp_ref, wih_ref, whh_ref, bg_ref,
                    wfc_ref, bfc_ref, out_ref, *, batch, seq):
    """project1 + LSTM recurrence + fc, single invocation, no scratch.

    x_ref:   (B*T, D)  flat batch-major input (row b*T + t)
    wp_ref:  (D, I)    project1 weight^T,   bp_ref: (1, I)
    wih_ref: (I, 4H)   lstm W_ih^T (native PyTorch gate order i, f, g, o)
    whh_ref: (H, 4H)   lstm W_hh^T (native gate order)
    bg_ref:  (1, 4H)   b_ih + b_hh
    wfc_ref: (H, C)    fc weight^T,          bfc_ref: (1, C)
    out_ref: (B, T, C) batch-first output
    """
    B, T = batch, seq
    H = whh_ref.shape[0]
    f32 = jnp.float32

    # ---- project1 (Linear 3->6 + ReLU) and hoisted x @ W_ih for all rows ----
    # One parallel (B*T)-row matmul each; off the serial recurrence chain.
    x = x_ref[...]                                                     # (BT, D)
    xp = jnp.maximum(
        jnp.dot(x, wp_ref[...], preferred_element_type=f32) + bp_ref[...], 0.0)
    gx = jnp.dot(xp, wih_ref[...], preferred_element_type=f32) + bg_ref[...]  # (BT, 4H)
    # (B*T, 4H) -> (B, T, 4H): identical (8,128) tile layout, no data movement.
    gx3 = gx.reshape(B, T, 4 * H)

    whh = whh_ref[...]                                                 # (H, 4H)
    whh_rows = [whh[k:k + 1, :] for k in range(H)]                     # hoisted (1, 4H)
    wfc = wfc_ref[...]
    bfc = bfc_ref[...]

    # ---- LSTM recurrence, fully unrolled (T static), gate order i, f, g, o ----
    h = jnp.zeros((B, H), f32)
    c = jnp.zeros((B, H), f32)
    for t in range(T):
        # Recurrent term h @ W_hh^T as H splat-FMAs on the VPU: avoids a
        # serial MXU push->pop round trip on every step of the chain.
        terms = [gx3[:, t, :]] + [h[:, k:k + 1] * whh_rows[k] for k in range(H)]
        gates = _tree_sum(terms)                                       # (B, 4H)

        # Transcendentals over the whole gate vreg; slice afterwards.
        sig = 0.5 * jnp.tanh(0.5 * gates) + 0.5                        # sigmoid(gates)
        tan = jnp.tanh(gates)
        i_g = sig[:, 0 * H:1 * H]
        f_g = sig[:, 1 * H:2 * H]
        g_g = tan[:, 2 * H:3 * H]
        o_g = sig[:, 3 * H:4 * H]

        c = f_g * c + i_g * g_g
        h = o_g * jnp.tanh(c)

        # fc (Linear 6->8) per timestep, written straight to the output block.
        # Not on the recurrence dependency chain -> overlaps on the MXU.
        out_ref[:, t, :] = jnp.dot(h, wfc, preferred_element_type=f32) + bfc


def init_params(key):
    """PyTorch-layout parameters, uniform(-k, k) init like nn.Linear / nn.LSTM."""
    ks = jax.random.split(key, 8)

    def u(k, shape, bound):
        return jax.random.uniform(k, shape, jnp.float32, -bound, bound)

    kp = 1.0 / np.sqrt(INPUT_DIM)
    kl = 1.0 / np.sqrt(HIDDEN)
    kf = 1.0 / np.sqrt(HIDDEN)
    return {
        "w_p":  u(ks[0], (LSTM_IN, INPUT_DIM), kp),        # project1 weight (6, 3)
        "b_p":  u(ks[1], (LSTM_IN,), kp),
        "w_ih": u(ks[2], (4 * HIDDEN, LSTM_IN), kl),       # gate order i, f, g, o
        "w_hh": u(ks[3], (4 * HIDDEN, HIDDEN), kl),
        "b_ih": u(ks[4], (4 * HIDDEN,), kl),
        "b_hh": u(ks[5], (4 * HIDDEN,), kl),
        "w_fc": u(ks[6], (NUM_CLASSES, HIDDEN), kf),       # fc weight (8, 6)
        "b_fc": u(ks[7], (NUM_CLASSES,), kf),
    }


def prepare_kernel_params(raw):
    """One-time offline prep: transposes + bias fusion (native gate order kept)."""
    return {
        "wp_t":  raw["w_p"].T,                                   # (D, I)
        "bp":    raw["b_p"].reshape(1, LSTM_IN),
        "wih_t": raw["w_ih"].T,                                  # (I, 4H)
        "whh_t": raw["w_hh"].T,                                  # (H, 4H)
        "bg":    (raw["b_ih"] + raw["b_hh"]).reshape(1, 4 * HIDDEN),
        "wfc_t": raw["w_fc"].T,                                  # (H, C)
        "bfc":   raw["b_fc"].reshape(1, NUM_CLASSES),
    }


@jax.jit
def toy_lstm_forward(feats, kparams):
    """feats: (B, T, 3) float32 -> (B, T, 8) float32."""
    B, T, D = feats.shape
    x_flat = feats.reshape(B * T, D)                             # metadata-only
    vmem = pl.BlockSpec(memory_space=pltpu.MemorySpace.VMEM)
    kernel = functools.partial(toy_lstm_kernel, batch=B, seq=T)
    return pl.pallas_call(
        kernel,
        out_shape=jax.ShapeDtypeStruct((B, T, NUM_CLASSES), jnp.float32),
        in_specs=[vmem] * 8,
        out_specs=vmem,
    )(x_flat, kparams["wp_t"], kparams["bp"], kparams["wih_t"], kparams["whh_t"],
      kparams["bg"], kparams["wfc_t"], kparams["bfc"])


def toy_lstm_reference(feats, raw):
    """Pure-JAX reference with PyTorch semantics (gate order i, f, g, o)."""
    x = jnp.maximum(feats @ raw["w_p"].T + raw["b_p"], 0.0)      # (B, T, I)
    B, T = x.shape[0], x.shape[1]
    H = HIDDEN
    wih_t = raw["w_ih"].T
    whh_t = raw["w_hh"].T
    bg = raw["b_ih"] + raw["b_hh"]
    h = jnp.zeros((B, H), jnp.float32)
    c = jnp.zeros((B, H), jnp.float32)
    hs = []
    for t in range(T):
        gates = x[:, t] @ wih_t + h @ whh_t + bg
        i_g = jax.nn.sigmoid(gates[:, 0 * H:1 * H])
        f_g = jax.nn.sigmoid(gates[:, 1 * H:2 * H])
        g_g = jnp.tanh(gates[:, 2 * H:3 * H])
        o_g = jax.nn.sigmoid(gates[:, 3 * H:4 * H])
        c = f_g * c + i_g * g_g
        h = o_g * jnp.tanh(c)
        hs.append(h)
    hseq = jnp.stack(hs, axis=1)                                 # (B, T, H)
    return hseq @ raw["w_fc"].T + raw["b_fc"]                    # (B, T, C)


if __name__ == "__main__":
    key = jax.random.PRNGKey(0)
    k_param, k_data = jax.random.split(key)

    B, T = 2, 8                                                  # seq_len = 8
    feats = jax.random.normal(k_data, (B, T, INPUT_DIM), jnp.float32)

    raw_params = init_params(k_param)
    kernel_params = prepare_kernel_params(raw_params)            # one-time prep

    out = jax.block_until_ready(toy_lstm_forward(feats, kernel_params))
    ref = toy_lstm_reference(feats, raw_params)

    assert out.shape == (B, T, NUM_CLASSES), out.shape
    assert np.allclose(np.asarray(out), np.asarray(ref), atol=1e-2, rtol=1e-2), (
        float(np.max(np.abs(np.asarray(out) - np.asarray(ref)))))
    print("KERNEL_OK")
</pallas_src>

<mosaic_0001>
module attributes {stable_mosaic.version = 11 : i64} {
  func.func @toy_lstm_kernel(%arg0: memref<16x3xf32, #tpu.memory_space<vmem>>, %arg1: memref<3x6xf32, #tpu.memory_space<vmem>>, %arg2: memref<1x6xf32, #tpu.memory_space<vmem>>, %arg3: memref<6x24xf32, #tpu.memory_space<vmem>>, %arg4: memref<6x24xf32, #tpu.memory_space<vmem>>, %arg5: memref<1x24xf32, #tpu.memory_space<vmem>>, %arg6: memref<6x8xf32, #tpu.memory_space<vmem>>, %arg7: memref<1x8xf32, #tpu.memory_space<vmem>>, %arg8: memref<2x8x8xf32, #tpu.memory_space<vmem>>) attributes {dimension_semantics = [], scalar_prefetch = 0 : i64, scratch_operands = 0 : i64, tpu.core_type = #tpu.core_type<tc>} {
    %c0 = arith.constant 0 : index
    %c0_0 = arith.constant 0 : index
    %0 = vector.load %arg0[%c0, %c0_0] : memref<16x3xf32, #tpu.memory_space<vmem>>, vector<16x3xf32>
    %c0_1 = arith.constant 0 : index
    %c0_2 = arith.constant 0 : index
    %1 = vector.load %arg1[%c0_1, %c0_2] : memref<3x6xf32, #tpu.memory_space<vmem>>, vector<3x6xf32>
    %cst = arith.constant dense<0.000000e+00> : vector<16x6xf32>
    %2 = tpu.matmul %0, %1, %cst {dimension_numbers = #tpu.dot_dimension_numbers<[1], [0], [0], [1], [0, 0, 1, 1], [], []>} : vector<16x3xf32>, vector<3x6xf32>, vector<16x6xf32> -> vector<16x6xf32>
    %c0_3 = arith.constant 0 : index
    %c0_4 = arith.constant 0 : index
    %3 = vector.load %arg2[%c0_3, %c0_4] : memref<1x6xf32, #tpu.memory_space<vmem>>, vector<1x6xf32>
    %4 = vector.broadcast %3 : vector<1x6xf32> to vector<16x6xf32>
    %5 = arith.addf %2, %4 : vector<16x6xf32>
    %cst_5 = arith.constant 0.000000e+00 : f32
    %6 = vector.broadcast %cst_5 : f32 to vector<16x6xf32>
    %7 = arith.maximumf %5, %6 : vector<16x6xf32>
    %c0_6 = arith.constant 0 : index
    %c0_7 = arith.constant 0 : index
    %8 = vector.load %arg3[%c0_6, %c0_7] : memref<6x24xf32, #tpu.memory_space<vmem>>, vector<6x24xf32>
    %cst_8 = arith.constant dense<0.000000e+00> : vector<16x24xf32>
    %9 = tpu.matmul %7, %8, %cst_8 {dimension_numbers = #tpu.dot_dimension_numbers<[1], [0], [0], [1], [0, 0, 1, 1], [], []>} : vector<16x6xf32>, vector<6x24xf32>, vector<16x24xf32> -> vector<16x24xf32>
    %c0_9 = arith.constant 0 : index
    %c0_10 = arith.constant 0 : index
    %10 = vector.load %arg5[%c0_9, %c0_10] : memref<1x24xf32, #tpu.memory_space<vmem>>, vector<1x24xf32>
    %11 = vector.broadcast %10 : vector<1x24xf32> to vector<16x24xf32>
    %12 = arith.addf %9, %11 : vector<16x24xf32>
    %13 = vector.shape_cast %12 : vector<16x24xf32> to vector<2x8x24xf32>
    %c0_11 = arith.constant 0 : index
    %c0_12 = arith.constant 0 : index
    %14 = vector.load %arg4[%c0_11, %c0_12] : memref<6x24xf32, #tpu.memory_space<vmem>>, vector<6x24xf32>
    %15 = vector.extract_strided_slice %14 {offsets = [0, 0], sizes = [1, 24], strides = [1, 1]} : vector<6x24xf32> to vector<1x24xf32>
    %16 = vector.extract_strided_slice %14 {offsets = [1, 0], sizes = [1, 24], strides = [1, 1]} : vector<6x24xf32> to vector<1x24xf32>
    %17 = vector.extract_strided_slice %14 {offsets = [2, 0], sizes = [1, 24], strides = [1, 1]} : vector<6x24xf32> to vector<1x24xf32>
    %18 = vector.extract_strided_slice %14 {offsets = [3, 0], sizes = [1, 24], strides = [1, 1]} : vector<6x24xf32> to vector<1x24xf32>
    %19 = vector.extract_strided_slice %14 {offsets = [4, 0], sizes = [1, 24], strides = [1, 1]} : vector<6x24xf32> to vector<1x24xf32>
    %20 = vector.extract_strided_slice %14 {offsets = [5, 0], sizes = [1, 24], strides = [1, 1]} : vector<6x24xf32> to vector<1x24xf32>
    %c0_13 = arith.constant 0 : index
    %c0_14 = arith.constant 0 : index
    %21 = vector.load %arg6[%c0_13, %c0_14] : memref<6x8xf32, #tpu.memory_space<vmem>>, vector<6x8xf32>
    %c0_15 = arith.constant 0 : index
    %c0_16 = arith.constant 0 : index
    %22 = vector.load %arg7[%c0_15, %c0_16] : memref<1x8xf32, #tpu.memory_space<vmem>>, vector<1x8xf32>
    %cst_17 = arith.constant 0.000000e+00 : f32
    %23 = vector.broadcast %cst_17 : f32 to vector<2x6xf32>
    %cst_18 = arith.constant 0.000000e+00 : f32
    %24 = vector.broadcast %cst_18 : f32 to vector<2x6xf32>
    %25 = vector.extract_strided_slice %13 {offsets = [0, 0, 0], sizes = [2, 1, 24], strides = [1, 1, 1]} : vector<2x8x24xf32> to vector<2x1x24xf32>
    %26 = vector.shape_cast %25 : vector<2x1x24xf32> to vector<2x24xf32>
    %27 = vector.extract_strided_slice %23 {offsets = [0, 0], sizes = [2, 1], strides = [1, 1]} : vector<2x6xf32> to vector<2x1xf32>
    %28 = vector.broadcast %27 : vector<2x1xf32> to vector<2x24xf32>
    %29 = vector.broadcast %15 : vector<1x24xf32> to vector<2x24xf32>
    %30 = arith.mulf %28, %29 : vector<2x24xf32>
    %31 = vector.extract_strided_slice %23 {offsets = [0, 1], sizes = [2, 1], strides = [1, 1]} : vector<2x6xf32> to vector<2x1xf32>
    %32 = vector.broadcast %31 : vector<2x1xf32> to vector<2x24xf32>
    %33 = vector.broadcast %16 : vector<1x24xf32> to vector<2x24xf32>
    %34 = arith.mulf %32, %33 : vector<2x24xf32>
    %35 = vector.extract_strided_slice %23 {offsets = [0, 2], sizes = [2, 1], strides = [1, 1]} : vector<2x6xf32> to vector<2x1xf32>
    %36 = vector.broadcast %35 : vector<2x1xf32> to vector<2x24xf32>
    %37 = vector.broadcast %17 : vector<1x24xf32> to vector<2x24xf32>
    %38 = arith.mulf %36, %37 : vector<2x24xf32>
    %39 = vector.extract_strided_slice %23 {offsets = [0, 3], sizes = [2, 1], strides = [1, 1]} : vector<2x6xf32> to vector<2x1xf32>
    %40 = vector.broadcast %39 : vector<2x1xf32> to vector<2x24xf32>
    %41 = vector.broadcast %18 : vector<1x24xf32> to vector<2x24xf32>
    %42 = arith.mulf %40, %41 : vector<2x24xf32>
    %43 = vector.extract_strided_slice %23 {offsets = [0, 4], sizes = [2, 1], strides = [1, 1]} : vector<2x6xf32> to vector<2x1xf32>
    %44 = vector.broadcast %43 : vector<2x1xf32> to vector<2x24xf32>
    %45 = vector.broadcast %19 : vector<1x24xf32> to vector<2x24xf32>
    %46 = arith.mulf %44, %45 : vector<2x24xf32>
    %47 = vector.extract_strided_slice %23 {offsets = [0, 5], sizes = [2, 1], strides = [1, 1]} : vector<2x6xf32> to vector<2x1xf32>
    %48 = vector.broadcast %47 : vector<2x1xf32> to vector<2x24xf32>
    %49 = vector.broadcast %20 : vector<1x24xf32> to vector<2x24xf32>
    %50 = arith.mulf %48, %49 : vector<2x24xf32>
    %51 = arith.addf %26, %30 : vector<2x24xf32>
    %52 = arith.addf %34, %38 : vector<2x24xf32>
    %53 = arith.addf %42, %46 : vector<2x24xf32>
    %54 = arith.addf %51, %52 : vector<2x24xf32>
    %55 = arith.addf %53, %50 : vector<2x24xf32>
    %56 = arith.addf %54, %55 : vector<2x24xf32>
    %cst_19 = arith.constant 5.000000e-01 : f32
    %57 = vector.broadcast %cst_19 : f32 to vector<2x24xf32>
    %58 = arith.mulf %57, %56 : vector<2x24xf32>
    %59 = math.tanh %58 : vector<2x24xf32>
    %cst_20 = arith.constant 5.000000e-01 : f32
    %60 = vector.broadcast %cst_20 : f32 to vector<2x24xf32>
    %61 = arith.mulf %60, %59 : vector<2x24xf32>
    %cst_21 = arith.constant 5.000000e-01 : f32
    %62 = vector.broadcast %cst_21 : f32 to vector<2x24xf32>
    %63 = arith.addf %61, %62 : vector<2x24xf32>
    %64 = math.tanh %56 : vector<2x24xf32>
    %65 = vector.extract_strided_slice %63 {offsets = [0, 0], sizes = [2, 6], strides = [1, 1]} : vector<2x24xf32> to vector<2x6xf32>
    %66 = vector.extract_strided_slice %63 {offsets = [0, 6], sizes = [2, 6], strides = [1, 1]} : vector<2x24xf32> to vector<2x6xf32>
    %67 = vector.extract_strided_slice %64 {offsets = [0, 12], sizes = [2, 6], strides = [1, 1]} : vector<2x24xf32> to vector<2x6xf32>
    %68 = vector.extract_strided_slice %63 {offsets = [0, 18], sizes = [2, 6], strides = [1, 1]} : vector<2x24xf32> to vector<2x6xf32>
    %69 = arith.mulf %66, %24 : vector<2x6xf32>
    %70 = arith.mulf %65, %67 : vector<2x6xf32>
    %71 = arith.addf %69, %70 : vector<2x6xf32>
    %72 = math.tanh %71 : vector<2x6xf32>
    %73 = arith.mulf %68, %72 : vector<2x6xf32>
    %cst_22 = arith.constant dense<0.000000e+00> : vector<2x8xf32>
    %74 = tpu.matmul %73, %21, %cst_22 {dimension_numbers = #tpu.dot_dimension_numbers<[1], [0], [0], [1], [0, 0, 1, 1], [], []>} : vector<2x6xf32>, vector<6x8xf32>, vector<2x8xf32> -> vector<2x8xf32>
    %75 = vector.broadcast %22 : vector<1x8xf32> to vector<2x8xf32>
    %76 = arith.addf %74, %75 : vector<2x8xf32>
    %c0_23 = arith.constant 0 : index
    %c0_24 = arith.constant 0 : index
    %c0_25 = arith.constant 0 : index
    %77 = vector.load %arg8[%c0_23, %c0_24, %c0_25] : memref<2x8x8xf32, #tpu.memory_space<vmem>>, vector<2x1x8xf32>
    %78 = vector.shape_cast %77 : vector<2x1x8xf32> to vector<2x8xf32>
    %79 = vector.shape_cast %76 : vector<2x8xf32> to vector<2x1x8xf32>
    tpu.vector_store %arg8[%c0_23, %c0_24, %c0_25], %79 {strides = array<i32>} : memref<2x8x8xf32, #tpu.memory_space<vmem>>, vector<2x1x8xf32>,
    %80 = vector.extract_strided_slice %13 {offsets = [0, 1, 0], sizes = [2, 1, 24], strides = [1, 1, 1]} : vector<2x8x24xf32> to vector<2x1x24xf32>
    %81 = vector.shape_cast %80 : vector<2x1x24xf32> to vector<2x24xf32>
    %82 = vector.extract_strided_slice %73 {offsets = [0, 0], sizes = [2, 1], strides = [1, 1]} : vector<2x6xf32> to vector<2x1xf32>
    %83 = vector.broadcast %82 : vector<2x1xf32> to vector<2x24xf32>
    %84 = vector.broadcast %15 : vector<1x24xf32> to vector<2x24xf32>
    %85 = arith.mulf %83, %84 : vector<2x24xf32>
    %86 = vector.extract_strided_slice %73 {offsets = [0, 1], sizes = [2, 1], strides = [1, 1]} : vector<2x6xf32> to vector<2x1xf32>
    %87 = vector.broadcast %86 : vector<2x1xf32> to vector<2x24xf32>
    %88 = vector.broadcast %16 : vector<1x24xf32> to vector<2x24xf32>
    %89 = arith.mulf %87, %88 : vector<2x24xf32>
    %90 = vector.extract_strided_slice %73 {offsets = [0, 2], sizes = [2, 1], strides = [1, 1]} : vector<2x6xf32> to vector<2x1xf32>
    %91 = vector.broadcast %90 : vector<2x1xf32> to vector<2x24xf32>
    %92 = vector.broadcast %17 : vector<1x24xf32> to vector<2x24xf32>
    %93 = arith.mulf %91, %92 : vector<2x24xf32>
    %94 = vector.extract_strided_slice %73 {offsets = [0, 3], sizes = [2, 1], strides = [1, 1]} : vector<2x6xf32> to vector<2x1xf32>
    %95 = vector.broadcast %94 : vector<2x1xf32> to vector<2x24xf32>
    %96 = vector.broadcast %18 : vector<1x24xf32> to vector<2x24xf32>
    %97 = arith.mulf %95, %96 : vector<2x24xf32>
    %98 = vector.extract_strided_slice %73 {offsets = [0, 4], sizes = [2, 1], strides = [1, 1]} : vector<2x6xf32> to vector<2x1xf32>
    %99 = vector.broadcast %98 : vector<2x1xf32> to vector<2x24xf32>
    %100 = vector.broadcast %19 : vector<1x24xf32> to vector<2x24xf32>
    %101 = arith.mulf %99, %100 : vector<2x24xf32>
    %102 = vector.extract_strided_slice %73 {offsets = [0, 5], sizes = [2, 1], strides = [1, 1]} : vector<2x6xf32> to vector<2x1xf32>
    %103 = vector.broadcast %102 : vector<2x1xf32> to vector<2x24xf32>
    %104 = vector.broadcast %20 : vector<1x24xf32> to vector<2x24xf32>
    %105 = arith.mulf %103, %104 : vector<2x24xf32>
    %106 = arith.addf %81, %85 : vector<2x24xf32>
    %107 = arith.addf %89, %93 : vector<2x24xf32>
    %108 = arith.addf %97, %101 : vector<2x24xf32>
    %109 = arith.addf %106, %107 : vector<2x24xf32>
    %110 = arith.addf %108, %105 : vector<2x24xf32>
    %111 = arith.addf %109, %110 : vector<2x24xf32>
    %cst_26 = arith.constant 5.000000e-01 : f32
    %112 = vector.broadcast %cst_26 : f32 to vector<2x24xf32>
    %113 = arith.mulf %112, %111 : vector<2x24xf32>
    %114 = math.tanh %113 : vector<2x24xf32>
    %cst_27 = arith.constant 5.000000e-01 : f32
    %115 = vector.broadcast %cst_27 : f32 to vector<2x24xf32>
    %116 = arith.mulf %115, %114 : vector<2x24xf32>
    %cst_28 = arith.constant 5.000000e-01 : f32
    %117 = vector.broadcast %cst_28 : f32 to vector<2x24xf32>
    %118 = arith.addf %116, %117 : vector<2x24xf32>
    %119 = math.tanh %111 : vector<2x24xf32>
    %120 = vector.extract_strided_slice %118 {offsets = [0, 0], sizes = [2, 6], strides = [1, 1]} : vector<2x24xf32> to vector<2x6xf32>
    %121 = vector.extract_strided_slice %118 {offsets = [0, 6], sizes = [2, 6], strides = [1, 1]} : vector<2x24xf32> to vector<2x6xf32>
    %122 = vector.extract_strided_slice %119 {offsets = [0, 12], sizes = [2, 6], strides = [1, 1]} : vector<2x24xf32> to vector<2x6xf32>
    %123 = vector.extract_strided_slice %118 {offsets = [0, 18], sizes = [2, 6], strides = [1, 1]} : vector<2x24xf32> to vector<2x6xf32>
    %124 = arith.mulf %121, %71 : vector<2x6xf32>
    %125 = arith.mulf %120, %122 : vector<2x6xf32>
    %126 = arith.addf %124, %125 : vector<2x6xf32>
    %127 = math.tanh %126 : vector<2x6xf32>
    %128 = arith.mulf %123, %127 : vector<2x6xf32>
    %cst_29 = arith.constant dense<0.000000e+00> : vector<2x8xf32>
    %129 = tpu.matmul %128, %21, %cst_29 {dimension_numbers = #tpu.dot_dimension_numbers<[1], [0], [0], [1], [0, 0, 1, 1], [], []>} : vector<2x6xf32>, vector<6x8xf32>, vector<2x8xf32> -> vector<2x8xf32>
    %130 = vector.broadcast %22 : vector<1x8xf32> to vector<2x8xf32>
    %131 = arith.addf %129, %130 : vector<2x8xf32>
    %c0_30 = arith.constant 0 : index
    %c1 = arith.constant 1 : index
    %c0_31 = arith.constant 0 : index
    %132 = vector.load %arg8[%c0_30, %c1, %c0_31] : memref<2x8x8xf32, #tpu.memory_space<vmem>>, vector<2x1x8xf32>
    %133 = vector.shape_cast %132 : vector<2x1x8xf32> to vector<2x8xf32>
    %134 = vector.shape_cast %131 : vector<2x8xf32> to vector<2x1x8xf32>
    tpu.vector_store %arg8[%c0_30, %c1, %c0_31], %134 {strides = array<i32>} : memref<2x8x8xf32, #tpu.memory_space<vmem>>, vector<2x1x8xf32>,
    %135 = vector.extract_strided_slice %13 {offsets = [0, 2, 0], sizes = [2, 1, 24], strides = [1, 1, 1]} : vector<2x8x24xf32> to vector<2x1x24xf32>
    %136 = vector.shape_cast %135 : vector<2x1x24xf32> to vector<2x24xf32>
    %137 = vector.extract_strided_slice %128 {offsets = [0, 0], sizes = [2, 1], strides = [1, 1]} : vector<2x6xf32> to vector<2x1xf32>
    %138 = vector.broadcast %137 : vector<2x1xf32> to vector<2x24xf32>
    %139 = vector.broadcast %15 : vector<1x24xf32> to vector<2x24xf32>
    %140 = arith.mulf %138, %139 : vector<2x24xf32>
    %141 = vector.extract_strided_slice %128 {offsets = [0, 1], sizes = [2, 1], strides = [1, 1]} : vector<2x6xf32> to vector<2x1xf32>
    %142 = vector.broadcast %141 : vector<2x1xf32> to vector<2x24xf32>
    %143 = vector.broadcast %16 : vector<1x24xf32> to vector<2x24xf32>
    %144 = arith.mulf %142, %143 : vector<2x24xf32>
    %145 = vector.extract_strided_slice %128 {offsets = [0, 2], sizes = [2, 1], strides = [1, 1]} : vector<2x6xf32> to vector<2x1xf32>
    %146 = vector.broadcast %145 : vector<2x1xf32> to vector<2x24xf32>
    %147 = vector.broadcast %17 : vector<1x24xf32> to vector<2x24xf32>
    %148 = arith.mulf %146, %147 : vector<2x24xf32>
    %149 = vector.extract_strided_slice %128 {offsets = [0, 3], sizes = [2, 1], strides = [1, 1]} : vector<2x6xf32> to vector<2x1xf32>
    %150 = vector.broadcast %149 : vector<2x1xf32> to vector<2x24xf32>
    %151 = vector.broadcast %18 : vector<1x24xf32> to vector<2x24xf32>
    %152 = arith.mulf %150, %151 : vector<2x24xf32>
    %153 = vector.extract_strided_slice %128 {offsets = [0, 4], sizes = [2, 1], strides = [1, 1]} : vector<2x6xf32> to vector<2x1xf32>
    %154 = vector.broadcast %153 : vector<2x1xf32> to vector<2x24xf32>
    %155 = vector.broadcast %19 : vector<1x24xf32> to vector<2x24xf32>
    %156 = arith.mulf %154, %155 : vector<2x24xf32>
    %157 = vector.extract_strided_slice %128 {offsets = [0, 5], sizes = [2, 1], strides = [1, 1]} : vector<2x6xf32> to vector<2x1xf32>
    %158 = vector.broadcast %157 : vector<2x1xf32> to vector<2x24xf32>
    %159 = vector.broadcast %20 : vector<1x24xf32> to vector<2x24xf32>
    %160 = arith.mulf %158, %159 : vector<2x24xf32>
    %161 = arith.addf %136, %140 : vector<2x24xf32>
    %162 = arith.addf %144, %148 : vector<2x24xf32>
    %163 = arith.addf %152, %156 : vector<2x24xf32>
    %164 = arith.addf %161, %162 : vector<2x24xf32>
    %165 = arith.addf %163, %160 : vector<2x24xf32>
    %166 = arith.addf %164, %165 : vector<2x24xf32>
    %cst_32 = arith.constant 5.000000e-01 : f32
    %167 = vector.broadcast %cst_32 : f32 to vector<2x24xf32>
    %168 = arith.mulf %167, %166 : vector<2x24xf32>
    %169 = math.tanh %168 : vector<2x24xf32>
    %cst_33 = arith.constant 5.000000e-01 : f32
    %170 = vector.broadcast %cst_33 : f32 to vector<2x24xf32>
    %171 = arith.mulf %170, %169 : vector<2x24xf32>
    %cst_34 = arith.constant 5.000000e-01 : f32
    %172 = vector.broadcast %cst_34 : f32 to vector<2x24xf32>
    %173 = arith.addf %171, %172 : vector<2x24xf32>
    %174 = math.tanh %166 : vector<2x24xf32>
    %175 = vector.extract_strided_slice %173 {offsets = [0, 0], sizes = [2, 6], strides = [1, 1]} : vector<2x24xf32> to vector<2x6xf32>
    %176 = vector.extract_strided_slice %173 {offsets = [0, 6], sizes = [2, 6], strides = [1, 1]} : vector<2x24xf32> to vector<2x6xf32>
    %177 = vector.extract_strided_slice %174 {offsets = [0, 12], sizes = [2, 6], strides = [1, 1]} : vector<2x24xf32> to vector<2x6xf32>
    %178 = vector.extract_strided_slice %173 {offsets = [0, 18], sizes = [2, 6], strides = [1, 1]} : vector<2x24xf32> to vector<2x6xf32>
    %179 = arith.mulf %176, %126 : vector<2x6xf32>
    %180 = arith.mulf %175, %177 : vector<2x6xf32>
    %181 = arith.addf %179, %180 : vector<2x6xf32>
    %182 = math.tanh %181 : vector<2x6xf32>
    %183 = arith.mulf %178, %182 : vector<2x6xf32>
    %cst_35 = arith.constant dense<0.000000e+00> : vector<2x8xf32>
    %184 = tpu.matmul %183, %21, %cst_35 {dimension_numbers = #tpu.dot_dimension_numbers<[1], [0], [0], [1], [0, 0, 1, 1], [], []>} : vector<2x6xf32>, vector<6x8xf32>, vector<2x8xf32> -> vector<2x8xf32>
    %185 = vector.broadcast %22 : vector<1x8xf32> to vector<2x8xf32>
    %186 = arith.addf %184, %185 : vector<2x8xf32>
    %c0_36 = arith.constant 0 : index
    %c2 = arith.constant 2 : index
    %c0_37 = arith.constant 0 : index
    %187 = vector.load %arg8[%c0_36, %c2, %c0_37] : memref<2x8x8xf32, #tpu.memory_space<vmem>>, vector<2x1x8xf32>
    %188 = vector.shape_cast %187 : vector<2x1x8xf32> to vector<2x8xf32>
    %189 = vector.shape_cast %186 : vector<2x8xf32> to vector<2x1x8xf32>
    tpu.vector_store %arg8[%c0_36, %c2, %c0_37], %189 {strides = array<i32>} : memref<2x8x8xf32, #tpu.memory_space<vmem>>, vector<2x1x8xf32>,
    %190 = vector.extract_strided_slice %13 {offsets = [0, 3, 0], sizes = [2, 1, 24], strides = [1, 1, 1]} : vector<2x8x24xf32> to vector<2x1x24xf32>
    %191 = vector.shape_cast %190 : vector<2x1x24xf32> to vector<2x24xf32>
    %192 = vector.extract_strided_slice %183 {offsets = [0, 0], sizes = [2, 1], strides = [1, 1]} : vector<2x6xf32> to vector<2x1xf32>
    %193 = vector.broadcast %192 : vector<2x1xf32> to vector<2x24xf32>
    %194 = vector.broadcast %15 : vector<1x24xf32> to vector<2x24xf32>
    %195 = arith.mulf %193, %194 : vector<2x24xf32>
    %196 = vector.extract_strided_slice %183 {offsets = [0, 1], sizes = [2, 1], strides = [1, 1]} : vector<2x6xf32> to vector<2x1xf32>
    %197 = vector.broadcast %196 : vector<2x1xf32> to vector<2x24xf32>
    %198 = vector.broadcast %16 : vector<1x24xf32> to vector<2x24xf32>
    %199 = arith.mulf %197, %198 : vector<2x24xf32>
    %200 = vector.extract_strided_slice %183 {offsets = [0, 2], sizes = [2, 1], strides = [1, 1]} : vector<2x6xf32> to vector<2x1xf32>
    %201 = vector.broadcast %200 : vector<2x1xf32> to vector<2x24xf32>
    %202 = vector.broadcast %17 : vector<1x24xf32> to vector<2x24xf32>
    %203 = arith.mulf %201, %202 : vector<2x24xf32>
    %204 = vector.extract_strided_slice %183 {offsets = [0, 3], sizes = [2, 1], strides = [1, 1]} : vector<2x6xf32> to vector<2x1xf32>
    %205 = vector.broadcast %204 : vector<2x1xf32> to vector<2x24xf32>
    %206 = vector.broadcast %18 : vector<1x24xf32> to vector<2x24xf32>
    %207 = arith.mulf %205, %206 : vector<2x24xf32>
    %208 = vector.extract_strided_slice %183 {offsets = [0, 4], sizes = [2, 1], strides = [1, 1]} : vector<2x6xf32> to vector<2x1xf32>
    %209 = vector.broadcast %208 : vector<2x1xf32> to vector<2x24xf32>
    %210 = vector.broadcast %19 : vector<1x24xf32> to vector<2x24xf32>
    %211 = arith.mulf %209, %210 : vector<2x24xf32>
    %212 = vector.extract_strided_slice %183 {offsets = [0, 5], sizes = [2, 1], strides = [1, 1]} : vector<2x6xf32> to vector<2x1xf32>
    %213 = vector.broadcast %212 : vector<2x1xf32> to vector<2x24xf32>
    %214 = vector.broadcast %20 : vector<1x24xf32> to vector<2x24xf32>
    %215 = arith.mulf %213, %214 : vector<2x24xf32>
    %216 = arith.addf %191, %195 : vector<2x24xf32>
    %217 = arith.addf %199, %203 : vector<2x24xf32>
    %218 = arith.addf %207, %211 : vector<2x24xf32>
    %219 = arith.addf %216, %217 : vector<2x24xf32>
    %220 = arith.addf %218, %215 : vector<2x24xf32>
    %221 = arith.addf %219, %220 : vector<2x24xf32>
    %cst_38 = arith.constant 5.000000e-01 : f32
    %222 = vector.broadcast %cst_38 : f32 to vector<2x24xf32>
    %223 = arith.mulf %222, %221 : vector<2x24xf32>
    %224 = math.tanh %223 : vector<2x24xf32>
    %cst_39 = arith.constant 5.000000e-01 : f32
    %225 = vector.broadcast %cst_39 : f32 to vector<2x24xf32>
    %226 = arith.mulf %225, %224 : vector<2x24xf32>
    %cst_40 = arith.constant 5.000000e-01 : f32
    %227 = vector.broadcast %cst_40 : f32 to vector<2x24xf32>
    %228 = arith.addf %226, %227 : vector<2x24xf32>
    %229 = math.tanh %221 : vector<2x24xf32>
    %230 = vector.extract_strided_slice %228 {offsets = [0, 0], sizes = [2, 6], strides = [1, 1]} : vector<2x24xf32> to vector<2x6xf32>
    %231 = vector.extract_strided_slice %228 {offsets = [0, 6], sizes = [2, 6], strides = [1, 1]} : vector<2x24xf32> to vector<2x6xf32>
    %232 = vector.extract_strided_slice %229 {offsets = [0, 12], sizes = [2, 6], strides = [1, 1]} : vector<2x24xf32> to vector<2x6xf32>
    %233 = vector.extract_strided_slice %228 {offsets = [0, 18], sizes = [2, 6], strides = [1, 1]} : vector<2x24xf32> to vector<2x6xf32>
    %234 = arith.mulf %231, %181 : vector<2x6xf32>
    %235 = arith.mulf %230, %232 : vector<2x6xf32>
    %236 = arith.addf %234, %235 : vector<2x6xf32>
    %237 = math.tanh %236 : vector<2x6xf32>
    %238 = arith.mulf %233, %237 : vector<2x6xf32>
    %cst_41 = arith.constant dense<0.000000e+00> : vector<2x8xf32>
    %239 = tpu.matmul %238, %21, %cst_41 {dimension_numbers = #tpu.dot_dimension_numbers<[1], [0], [0], [1], [0, 0, 1, 1], [], []>} : vector<2x6xf32>, vector<6x8xf32>, vector<2x8xf32> -> vector<2x8xf32>
    %240 = vector.broadcast %22 : vector<1x8xf32> to vector<2x8xf32>
    %241 = arith.addf %239, %240 : vector<2x8xf32>
    %c0_42 = arith.constant 0 : index
    %c3 = arith.constant 3 : index
    %c0_43 = arith.constant 0 : index
    %242 = vector.load %arg8[%c0_42, %c3, %c0_43] : memref<2x8x8xf32, #tpu.memory_space<vmem>>, vector<2x1x8xf32>
    %243 = vector.shape_cast %242 : vector<2x1x8xf32> to vector<2x8xf32>
    %244 = vector.shape_cast %241 : vector<2x8xf32> to vector<2x1x8xf32>
    tpu.vector_store %arg8[%c0_42, %c3, %c0_43], %244 {strides = array<i32>} : memref<2x8x8xf32, #tpu.memory_space<vmem>>, vector<2x1x8xf32>,
    %245 = vector.extract_strided_slice %13 {offsets = [0, 4, 0], sizes = [2, 1, 24], strides = [1, 1, 1]} : vector<2x8x24xf32> to vector<2x1x24xf32>
    %246 = vector.shape_cast %245 : vector<2x1x24xf32> to vector<2x24xf32>
    %247 = vector.extract_strided_slice %238 {offsets = [0, 0], sizes = [2, 1], strides = [1, 1]} : vector<2x6xf32> to vector<2x1xf32>
    %248 = vector.broadcast %247 : vector<2x1xf32> to vector<2x24xf32>
    %249 = vector.broadcast %15 : vector<1x24xf32> to vector<2x24xf32>
    %250 = arith.mulf %248, %249 : vector<2x24xf32>
    %251 = vector.extract_strided_slice %238 {offsets = [0, 1], sizes = [2, 1], strides = [1, 1]} : vector<2x6xf32> to vector<2x1xf32>
    %252 = vector.broadcast %251 : vector<2x1xf32> to vector<2x24xf32>
    %253 = vector.broadcast %16 : vector<1x24xf32> to vector<2x24xf32>
    %254 = arith.mulf %252, %253 : vector<2x24xf32>
    %255 = vector.extract_strided_slice %238 {offsets = [0, 2], sizes = [2, 1], strides = [1, 1]} : vector<2x6xf32> to vector<2x1xf32>
    %256 = vector.broadcast %255 : vector<2x1xf32> to vector<2x24xf32>
    %257 = vector.broadcast %17 : vector<1x24xf32> to vector<2x24xf32>
    %258 = arith.mulf %256, %257 : vector<2x24xf32>
    %259 = vector.extract_strided_slice %238 {offsets = [0, 3], sizes = [2, 1], strides = [1, 1]} : vector<2x6xf32> to vector<2x1xf32>
    %260 = vector.broadcast %259 : vector<2x1xf32> to vector<2x24xf32>
    %261 = vector.broadcast %18 : vector<1x24xf32> to vector<2x24xf32>
    %262 = arith.mulf %260, %261 : vector<2x24xf32>
    %263 = vector.extract_strided_slice %238 {offsets = [0, 4], sizes = [2, 1], strides = [1, 1]} : vector<2x6xf32> to vector<2x1xf32>
    %264 = vector.broadcast %263 : vector<2x1xf32> to vector<2x24xf32>
    %265 = vector.broadcast %19 : vector<1x24xf32> to vector<2x24xf32>
    %266 = arith.mulf %264, %265 : vector<2x24xf32>
    %267 = vector.extract_strided_slice %238 {offsets = [0, 5], sizes = [2, 1], strides = [1, 1]} : vector<2x6xf32> to vector<2x1xf32>
    %268 = vector.broadcast %267 : vector<2x1xf32> to vector<2x24xf32>
    %269 = vector.broadcast %20 : vector<1x24xf32> to vector<2x24xf32>
    %270 = arith.mulf %268, %269 : vector<2x24xf32>
    %271 = arith.addf %246, %250 : vector<2x24xf32>
    %272 = arith.addf %254, %258 : vector<2x24xf32>
    %273 = arith.addf %262, %266 : vector<2x24xf32>
    %274 = arith.addf %271, %272 : vector<2x24xf32>
    %275 = arith.addf %273, %270 : vector<2x24xf32>
    %276 = arith.addf %274, %275 : vector<2x24xf32>
    %cst_44 = arith.constant 5.000000e-01 : f32
    %277 = vector.broadcast %cst_44 : f32 to vector<2x24xf32>
    %278 = arith.mulf %277, %276 : vector<2x24xf32>
    %279 = math.tanh %278 : vector<2x24xf32>
    %cst_45 = arith.constant 5.000000e-01 : f32
    %280 = vector.broadcast %cst_45 : f32 to vector<2x24xf32>
    %281 = arith.mulf %280, %279 : vector<2x24xf32>
    %cst_46 = arith.constant 5.000000e-01 : f32
    %282 = vector.broadcast %cst_46 : f32 to vector<2x24xf32>
    %283 = arith.addf %281, %282 : vector<2x24xf32>
    %284 = math.tanh %276 : vector<2x24xf32>
    %285 = vector.extract_strided_slice %283 {offsets = [0, 0], sizes = [2, 6], strides = [1, 1]} : vector<2x24xf32> to vector<2x6xf32>
    %286 = vector.extract_strided_slice %283 {offsets = [0, 6], sizes = [2, 6], strides = [1, 1]} : vector<2x24xf32> to vector<2x6xf32>
    %287 = vector.extract_strided_slice %284 {offsets = [0, 12], sizes = [2, 6], strides = [1, 1]} : vector<2x24xf32> to vector<2x6xf32>
    %288 = vector.extract_strided_slice %283 {offsets = [0, 18], sizes = [2, 6], strides = [1, 1]} : vector<2x24xf32> to vector<2x6xf32>
    %289 = arith.mulf %286, %236 : vector<2x6xf32>
    %290 = arith.mulf %285, %287 : vector<2x6xf32>
    %291 = arith.addf %289, %290 : vector<2x6xf32>
    %292 = math.tanh %291 : vector<2x6xf32>
    %293 = arith.mulf %288, %292 : vector<2x6xf32>
    %cst_47 = arith.constant dense<0.000000e+00> : vector<2x8xf32>
    %294 = tpu.matmul %293, %21, %cst_47 {dimension_numbers = #tpu.dot_dimension_numbers<[1], [0], [0], [1], [0, 0, 1, 1], [], []>} : vector<2x6xf32>, vector<6x8xf32>, vector<2x8xf32> -> vector<2x8xf32>
    %295 = vector.broadcast %22 : vector<1x8xf32> to vector<2x8xf32>
    %296 = arith.addf %294, %295 : vector<2x8xf32>
    %c0_48 = arith.constant 0 : index
    %c4 = arith.constant 4 : index
    %c0_49 = arith.constant 0 : index
    %297 = vector.load %arg8[%c0_48, %c4, %c0_49] : memref<2x8x8xf32, #tpu.memory_space<vmem>>, vector<2x1x8xf32>
    %298 = vector.shape_cast %297 : vector<2x1x8xf32> to vector<2x8xf32>
    %299 = vector.shape_cast %296 : vector<2x8xf32> to vector<2x1x8xf32>
    tpu.vector_store %arg8[%c0_48, %c4, %c0_49], %299 {strides = array<i32>} : memref<2x8x8xf32, #tpu.memory_space<vmem>>, vector<2x1x8xf32>,
    %300 = vector.extract_strided_slice %13 {offsets = [0, 5, 0], sizes = [2, 1, 24], strides = [1, 1, 1]} : vector<2x8x24xf32> to vector<2x1x24xf32>
    %301 = vector.shape_cast %300 : vector<2x1x24xf32> to vector<2x24xf32>
    %302 = vector.extract_strided_slice %293 {offsets = [0, 0], sizes = [2, 1], strides = [1, 1]} : vector<2x6xf32> to vector<2x1xf32>
    %303 = vector.broadcast %302 : vector<2x1xf32> to vector<2x24xf32>
    %304 = vector.broadcast %15 : vector<1x24xf32> to vector<2x24xf32>
    %305 = arith.mulf %303, %304 : vector<2x24xf32>
    %306 = vector.extract_strided_slice %293 {offsets = [0, 1], sizes = [2, 1], strides = [1, 1]} : vector<2x6xf32> to vector<2x1xf32>
    %307 = vector.broadcast %306 : vector<2x1xf32> to vector<2x24xf32>
    %308 = vector.broadcast %16 : vector<1x24xf32> to vector<2x24xf32>
    %309 = arith.mulf %307, %308 : vector<2x24xf32>
    %310 = vector.extract_strided_slice %293 {offsets = [0, 2], sizes = [2, 1], strides = [1, 1]} : vector<2x6xf32> to vector<2x1xf32>
    %311 = vector.broadcast %310 : vector<2x1xf32> to vector<2x24xf32>
    %312 = vector.broadcast %17 : vector<1x24xf32> to vector<2x24xf32>
    %313 = arith.mulf %311, %312 : vector<2x24xf32>
    %314 = vector.extract_strided_slice %293 {offsets = [0, 3], sizes = [2, 1], strides = [1, 1]} : vector<2x6xf32> to vector<2x1xf32>
    %315 = vector.broadcast %314 : vector<2x1xf32> to vector<2x24xf32>
    %316 = vector.broadcast %18 : vector<1x24xf32> to vector<2x24xf32>
    %317 = arith.mulf %315, %316 : vector<2x24xf32>
    %318 = vector.extract_strided_slice %293 {offsets = [0, 4], sizes = [2, 1], strides = [1, 1]} : vector<2x6xf32> to vector<2x1xf32>
    %319 = vector.broadcast %318 : vector<2x1xf32> to vector<2x24xf32>
    %320 = vector.broadcast %19 : vector<1x24xf32> to vector<2x24xf32>
    %321 = arith.mulf %319, %320 : vector<2x24xf32>
    %322 = vector.extract_strided_slice %293 {offsets = [0, 5], sizes = [2, 1], strides = [1, 1]} : vector<2x6xf32> to vector<2x1xf32>
    %323 = vector.broadcast %322 : vector<2x1xf32> to vector<2x24xf32>
    %324 = vector.broadcast %20 : vector<1x24xf32> to vector<2x24xf32>
    %325 = arith.mulf %323, %324 : vector<2x24xf32>
    %326 = arith.addf %301, %305 : vector<2x24xf32>
    %327 = arith.addf %309, %313 : vector<2x24xf32>
    %328 = arith.addf %317, %321 : vector<2x24xf32>
    %329 = arith.addf %326, %327 : vector<2x24xf32>
    %330 = arith.addf %328, %325 : vector<2x24xf32>
    %331 = arith.addf %329, %330 : vector<2x24xf32>
    %cst_50 = arith.constant 5.000000e-01 : f32
    %332 = vector.broadcast %cst_50 : f32 to vector<2x24xf32>
    %333 = arith.mulf %332, %331 : vector<2x24xf32>
    %334 = math.tanh %333 : vector<2x24xf32>
    %cst_51 = arith.constant 5.000000e-01 : f32
    %335 = vector.broadcast %cst_51 : f32 to vector<2x24xf32>
    %336 = arith.mulf %335, %334 : vector<2x24xf32>
    %cst_52 = arith.constant 5.000000e-01 : f32
    %337 = vector.broadcast %cst_52 : f32 to vector<2x24xf32>
    %338 = arith.addf %336, %337 : vector<2x24xf32>
    %339 = math.tanh %331 : vector<2x24xf32>
    %340 = vector.extract_strided_slice %338 {offsets = [0, 0], sizes = [2, 6], strides = [1, 1]} : vector<2x24xf32> to vector<2x6xf32>
    %341 = vector.extract_strided_slice %338 {offsets = [0, 6], sizes = [2, 6], strides = [1, 1]} : vector<2x24xf32> to vector<2x6xf32>
    %342 = vector.extract_strided_slice %339 {offsets = [0, 12], sizes = [2, 6], strides = [1, 1]} : vector<2x24xf32> to vector<2x6xf32>
    %343 = vector.extract_strided_slice %338 {offsets = [0, 18], sizes = [2, 6], strides = [1, 1]} : vector<2x24xf32> to vector<2x6xf32>
    %344 = arith.mulf %341, %291 : vector<2x6xf32>
    %345 = arith.mulf %340, %342 : vector<2x6xf32>
    %346 = arith.addf %344, %345 : vector<2x6xf32>
    %347 = math.tanh %346 : vector<2x6xf32>
    %348 = arith.mulf %343, %347 : vector<2x6xf32>
    %cst_53 = arith.constant dense<0.000000e+00> : vector<2x8xf32>
    %349 = tpu.matmul %348, %21, %cst_53 {dimension_numbers = #tpu.dot_dimension_numbers<[1], [0], [0], [1], [0, 0, 1, 1], [], []>} : vector<2x6xf32>, vector<6x8xf32>, vector<2x8xf32> -> vector<2x8xf32>
    %350 = vector.broadcast %22 : vector<1x8xf32> to vector<2x8xf32>
    %351 = arith.addf %349, %350 : vector<2x8xf32>
    %c0_54 = arith.constant 0 : index
    %c5 = arith.constant 5 : index
    %c0_55 = arith.constant 0 : index
    %352 = vector.load %arg8[%c0_54, %c5, %c0_55] : memref<2x8x8xf32, #tpu.memory_space<vmem>>, vector<2x1x8xf32>
    %353 = vector.shape_cast %352 : vector<2x1x8xf32> to vector<2x8xf32>
    %354 = vector.shape_cast %351 : vector<2x8xf32> to vector<2x1x8xf32>
    tpu.vector_store %arg8[%c0_54, %c5, %c0_55], %354 {strides = array<i32>} : memref<2x8x8xf32, #tpu.memory_space<vmem>>, vector<2x1x8xf32>,
    %355 = vector.extract_strided_slice %13 {offsets = [0, 6, 0], sizes = [2, 1, 24], strides = [1, 1, 1]} : vector<2x8x24xf32> to vector<2x1x24xf32>
    %356 = vector.shape_cast %355 : vector<2x1x24xf32> to vector<2x24xf32>
    %357 = vector.extract_strided_slice %348 {offsets = [0, 0], sizes = [2, 1], strides = [1, 1]} : vector<2x6xf32> to vector<2x1xf32>
    %358 = vector.broadcast %357 : vector<2x1xf32> to vector<2x24xf32>
    %359 = vector.broadcast %15 : vector<1x24xf32> to vector<2x24xf32>
    %360 = arith.mulf %358, %359 : vector<2x24xf32>
    %361 = vector.extract_strided_slice %348 {offsets = [0, 1], sizes = [2, 1], strides = [1, 1]} : vector<2x6xf32> to vector<2x1xf32>
    %362 = vector.broadcast %361 : vector<2x1xf32> to vector<2x24xf32>
    %363 = vector.broadcast %16 : vector<1x24xf32> to vector<2x24xf32>
    %364 = arith.mulf %362, %363 : vector<2x24xf32>
    %365 = vector.extract_strided_slice %348 {offsets = [0, 2], sizes = [2, 1], strides = [1, 1]} : vector<2x6xf32> to vector<2x1xf32>
    %366 = vector.broadcast %365 : vector<2x1xf32> to vector<2x24xf32>
    %367 = vector.broadcast %17 : vector<1x24xf32> to vector<2x24xf32>
    %368 = arith.mulf %366, %367 : vector<2x24xf32>
    %369 = vector.extract_strided_slice %348 {offsets = [0, 3], sizes = [2, 1], strides = [1, 1]} : vector<2x6xf32> to vector<2x1xf32>
    %370 = vector.broadcast %369 : vector<2x1xf32> to vector<2x24xf32>
    %371 = vector.broadcast %18 : vector<1x24xf32> to vector<2x24xf32>
    %372 = arith.mulf %370, %371 : vector<2x24xf32>
    %373 = vector.extract_strided_slice %348 {offsets = [0, 4], sizes = [2, 1], strides = [1, 1]} : vector<2x6xf32> to vector<2x1xf32>
    %374 = vector.broadcast %373 : vector<2x1xf32> to vector<2x24xf32>
    %375 = vector.broadcast %19 : vector<1x24xf32> to vector<2x24xf32>
    %376 = arith.mulf %374, %375 : vector<2x24xf32>
    %377 = vector.extract_strided_slice %348 {offsets = [0, 5], sizes = [2, 1], strides = [1, 1]} : vector<2x6xf32> to vector<2x1xf32>
    %378 = vector.broadcast %377 : vector<2x1xf32> to vector<2x24xf32>
    %379 = vector.broadcast %20 : vector<1x24xf32> to vector<2x24xf32>
    %380 = arith.mulf %378, %379 : vector<2x24xf32>
    %381 = arith.addf %356, %360 : vector<2x24xf32>
    %382 = arith.addf %364, %368 : vector<2x24xf32>
    %383 = arith.addf %372, %376 : vector<2x24xf32>
    %384 = arith.addf %381, %382 : vector<2x24xf32>
    %385 = arith.addf %383, %380 : vector<2x24xf32>
    %386 = arith.addf %384, %385 : vector<2x24xf32>
    %cst_56 = arith.constant 5.000000e-01 : f32
    %387 = vector.broadcast %cst_56 : f32 to vector<2x24xf32>
    %388 = arith.mulf %387, %386 : vector<2x24xf32>
    %389 = math.tanh %388 : vector<2x24xf32>
    %cst_57 = arith.constant 5.000000e-01 : f32
    %390 = vector.broadcast %cst_57 : f32 to vector<2x24xf32>
    %391 = arith.mulf %390, %389 : vector<2x24xf32>
    %cst_58 = arith.constant 5.000000e-01 : f32
    %392 = vector.broadcast %cst_58 : f32 to vector<2x24xf32>
    %393 = arith.addf %391, %392 : vector<2x24xf32>
    %394 = math.tanh %386 : vector<2x24xf32>
    %395 = vector.extract_strided_slice %393 {offsets = [0, 0], sizes = [2, 6], strides = [1, 1]} : vector<2x24xf32> to vector<2x6xf32>
    %396 = vector.extract_strided_slice %393 {offsets = [0, 6], sizes = [2, 6], strides = [1, 1]} : vector<2x24xf32> to vector<2x6xf32>
    %397 = vector.extract_strided_slice %394 {offsets = [0, 12], sizes = [2, 6], strides = [1, 1]} : vector<2x24xf32> to vector<2x6xf32>
    %398 = vector.extract_strided_slice %393 {offsets = [0, 18], sizes = [2, 6], strides = [1, 1]} : vector<2x24xf32> to vector<2x6xf32>
    %399 = arith.mulf %396, %346 : vector<2x6xf32>
    %400 = arith.mulf %395, %397 : vector<2x6xf32>
    %401 = arith.addf %399, %400 : vector<2x6xf32>
    %402 = math.tanh %401 : vector<2x6xf32>
    %403 = arith.mulf %398, %402 : vector<2x6xf32>
    %cst_59 = arith.constant dense<0.000000e+00> : vector<2x8xf32>
    %404 = tpu.matmul %403, %21, %cst_59 {dimension_numbers = #tpu.dot_dimension_numbers<[1], [0], [0], [1], [0, 0, 1, 1], [], []>} : vector<2x6xf32>, vector<6x8xf32>, vector<2x8xf32> -> vector<2x8xf32>
    %405 = vector.broadcast %22 : vector<1x8xf32> to vector<2x8xf32>
    %406 = arith.addf %404, %405 : vector<2x8xf32>
    %c0_60 = arith.constant 0 : index
    %c6 = arith.constant 6 : index
    %c0_61 = arith.constant 0 : index
    %407 = vector.load %arg8[%c0_60, %c6, %c0_61] : memref<2x8x8xf32, #tpu.memory_space<vmem>>, vector<2x1x8xf32>
    %408 = vector.shape_cast %407 : vector<2x1x8xf32> to vector<2x8xf32>
    %409 = vector.shape_cast %406 : vector<2x8xf32> to vector<2x1x8xf32>
    tpu.vector_store %arg8[%c0_60, %c6, %c0_61], %409 {strides = array<i32>} : memref<2x8x8xf32, #tpu.memory_space<vmem>>, vector<2x1x8xf32>,
    %410 = vector.extract_strided_slice %13 {offsets = [0, 7, 0], sizes = [2, 1, 24], strides = [1, 1, 1]} : vector<2x8x24xf32> to vector<2x1x24xf32>
    %411 = vector.shape_cast %410 : vector<2x1x24xf32> to vector<2x24xf32>
    %412 = vector.extract_strided_slice %403 {offsets = [0, 0], sizes = [2, 1], strides = [1, 1]} : vector<2x6xf32> to vector<2x1xf32>
    %413 = vector.broadcast %412 : vector<2x1xf32> to vector<2x24xf32>
    %414 = vector.broadcast %15 : vector<1x24xf32> to vector<2x24xf32>
    %415 = arith.mulf %413, %414 : vector<2x24xf32>
    %416 = vector.extract_strided_slice %403 {offsets = [0, 1], sizes = [2, 1], strides = [1, 1]} : vector<2x6xf32> to vector<2x1xf32>
    %417 = vector.broadcast %416 : vector<2x1xf32> to vector<2x24xf32>
    %418 = vector.broadcast %16 : vector<1x24xf32> to vector<2x24xf32>
    %419 = arith.mulf %417, %418 : vector<2x24xf32>
    %420 = vector.extract_strided_slice %403 {offsets = [0, 2], sizes = [2, 1], strides = [1, 1]} : vector<2x6xf32> to vector<2x1xf32>
    %421 = vector.broadcast %420 : vector<2x1xf32> to vector<2x24xf32>
    %422 = vector.broadcast %17 : vector<1x24xf32> to vector<2x24xf32>
    %423 = arith.mulf %421, %422 : vector<2x24xf32>
    %424 = vector.extract_strided_slice %403 {offsets = [0, 3], sizes = [2, 1], strides = [1, 1]} : vector<2x6xf32> to vector<2x1xf32>
    %425 = vector.broadcast %424 : vector<2x1xf32> to vector<2x24xf32>
    %426 = vector.broadcast %18 : vector<1x24xf32> to vector<2x24xf32>
    %427 = arith.mulf %425, %426 : vector<2x24xf32>
    %428 = vector.extract_strided_slice %403 {offsets = [0, 4], sizes = [2, 1], strides = [1, 1]} : vector<2x6xf32> to vector<2x1xf32>
    %429 = vector.broadcast %428 : vector<2x1xf32> to vector<2x24xf32>
    %430 = vector.broadcast %19 : vector<1x24xf32> to vector<2x24xf32>
    %431 = arith.mulf %429, %430 : vector<2x24xf32>
    %432 = vector.extract_strided_slice %403 {offsets = [0, 5], sizes = [2, 1], strides = [1, 1]} : vector<2x6xf32> to vector<2x1xf32>
    %433 = vector.broadcast %432 : vector<2x1xf32> to vector<2x24xf32>
    %434 = vector.broadcast %20 : vector<1x24xf32> to vector<2x24xf32>
    %435 = arith.mulf %433, %434 : vector<2x24xf32>
    %436 = arith.addf %411, %415 : vector<2x24xf32>
    %437 = arith.addf %419, %423 : vector<2x24xf32>
    %438 = arith.addf %427, %431 : vector<2x24xf32>
    %439 = arith.addf %436, %437 : vector<2x24xf32>
    %440 = arith.addf %438, %435 : vector<2x24xf32>
    %441 = arith.addf %439, %440 : vector<2x24xf32>
    %cst_62 = arith.constant 5.000000e-01 : f32
    %442 = vector.broadcast %cst_62 : f32 to vector<2x24xf32>
    %443 = arith.mulf %442, %441 : vector<2x24xf32>
    %444 = math.tanh %443 : vector<2x24xf32>
    %cst_63 = arith.constant 5.000000e-01 : f32
    %445 = vector.broadcast %cst_63 : f32 to vector<2x24xf32>
    %446 = arith.mulf %445, %444 : vector<2x24xf32>
    %cst_64 = arith.constant 5.000000e-01 : f32
    %447 = vector.broadcast %cst_64 : f32 to vector<2x24xf32>
    %448 = arith.addf %446, %447 : vector<2x24xf32>
    %449 = math.tanh %441 : vector<2x24xf32>
    %450 = vector.extract_strided_slice %448 {offsets = [0, 0], sizes = [2, 6], strides = [1, 1]} : vector<2x24xf32> to vector<2x6xf32>
    %451 = vector.extract_strided_slice %448 {offsets = [0, 6], sizes = [2, 6], strides = [1, 1]} : vector<2x24xf32> to vector<2x6xf32>
    %452 = vector.extract_strided_slice %449 {offsets = [0, 12], sizes = [2, 6], strides = [1, 1]} : vector<2x24xf32> to vector<2x6xf32>
    %453 = vector.extract_strided_slice %448 {offsets = [0, 18], sizes = [2, 6], strides = [1, 1]} : vector<2x24xf32> to vector<2x6xf32>
    %454 = arith.mulf %451, %401 : vector<2x6xf32>
    %455 = arith.mulf %450, %452 : vector<2x6xf32>
    %456 = arith.addf %454, %455 : vector<2x6xf32>
    %457 = math.tanh %456 : vector<2x6xf32>
    %458 = arith.mulf %453, %457 : vector<2x6xf32>
    %cst_65 = arith.constant dense<0.000000e+00> : vector<2x8xf32>
    %459 = tpu.matmul %458, %21, %cst_65 {dimension_numbers = #tpu.dot_dimension_numbers<[1], [0], [0], [1], [0, 0, 1, 1], [], []>} : vector<2x6xf32>, vector<6x8xf32>, vector<2x8xf32> -> vector<2x8xf32>
    %460 = vector.broadcast %22 : vector<1x8xf32> to vector<2x8xf32>
    %461 = arith.addf %459, %460 : vector<2x8xf32>
    %c0_66 = arith.constant 0 : index
    %c7 = arith.constant 7 : index
    %c0_67 = arith.constant 0 : index
    %462 = vector.load %arg8[%c0_66, %c7, %c0_67] : memref<2x8x8xf32, #tpu.memory_space<vmem>>, vector<2x1x8xf32>
    %463 = vector.shape_cast %462 : vector<2x1x8xf32> to vector<2x8xf32>
    %464 = vector.shape_cast %461 : vector<2x8xf32> to vector<2x1x8xf32>
    tpu.vector_store %arg8[%c0_66, %c7, %c0_67], %464 {strides = array<i32>} : memref<2x8x8xf32, #tpu.memory_space<vmem>>, vector<2x1x8xf32>,
    return
  }
}

</mosaic_0001>

<llo_original>
// kernel: toy_lstm_forward.1
$region0: #{toy_lstm_forward.1}
  #allocation0 [shape = 'u32[]', space=smem, size = 0x4, offset = 0x4, fixed_abs, tag = 'smem constant byte address 0x4 - core index']
  #allocation1 [shape = 'u32[144,128]{1,0:T(1,128)}', space=vmem, size = 0x12000, scoped, tag = 'internal scratch']
  %s0 = inlined_call_operand.vmem [shape: f32[16,3], index: 0, kind: input, shape index: {}]
  %s1 = inlined_call_operand.vmem [shape: f32[3,6], index: 1, kind: input, shape index: {}]
  %s2 = inlined_call_operand.vmem [shape: f32[1,6], index: 2, kind: input, shape index: {}]
  %s3 = inlined_call_operand.vmem [shape: f32[6,24], index: 3, kind: input, shape index: {}]
  %s4 = inlined_call_operand.vmem [shape: f32[6,24], index: 4, kind: input, shape index: {}]
  %s5 = inlined_call_operand.vmem [shape: f32[1,24], index: 5, kind: input, shape index: {}]
  %s6 = inlined_call_operand.vmem [shape: f32[6,8], index: 6, kind: input, shape index: {}]
  %s7 = inlined_call_operand.hbm [shape: f32[1,8], index: 7, kind: input, shape index: {}]
  %s8 = inlined_call_operand.hbm [shape: f32[2,8,8], index: 8, kind: output, shape index: {}]
  %s9 = sld [smem:[#allocation0]]
  $region46: #{toy_lstm_forward.1} parent=0
    _
  %s11 = ssub.s32 1, %s9
  %s12 = scalar_select 0, %s11, %s9
  $region1: #{toy_lstm_forward.1} parent=0
    #allocation2 [shape = 'u8[512]{0}', space=vmem, size = 0x400, scoped, tag = 'input window, operand 7, single buffered']
    #allocation3 [shape = 's32[1]{0}', space=sflag, size = 0x4, scoped, tag = 'scoped memory for toy_lstm_forward.1']
    #allocation4 [shape = 's32[1]{0}', space=sflag, size = 0x4, scoped, tag = 'scoped memory for toy_lstm_forward.1']
    #allocation5 [shape = 'u8[8192]{0}', space=vmem, size = 0x2000, scoped, tag = 'output window, operand 0, single buffered']
    %13 = vsyncpa [#allocation3], 0
    %14 = vsyncpa [#allocation4], 0
    // Predicated region
    $region2: #{toy_lstm_forward.1} parent=1 // pred_check
      _
    $region3: #{toy_lstm_forward.1} parent=1 // pred_check_branch
      %16 = sbr.rel (0) target = $region5
    $region4: #{toy_lstm_forward.1} parent=1 // pred_region
      _
    $region5: #{toy_lstm_forward.1} parent=1 // pred_fallthru
      _
    // Predicated region
    $region6: #{toy_lstm_forward.1} parent=1 // pred_check
      _
    $region7: #{toy_lstm_forward.1} parent=1 // pred_check_branch
      %18 = sbr.rel (0) target = $region9
    $region8: #{toy_lstm_forward.1} parent=1 // pred_region
      _
    $region9: #{toy_lstm_forward.1} parent=1 // pred_fallthru
      _
    // Predicated region
    $region10: #{toy_lstm_forward.1} parent=1 // pred_check
      _
    $region11: #{toy_lstm_forward.1} parent=1 // pred_check_branch
      %20 = sbr.rel (0) target = $region13
    $region12: #{toy_lstm_forward.1} parent=1 // pred_region
      _
    $region13: #{toy_lstm_forward.1} parent=1 // pred_fallthru
      _
    // Predicated region
    $region14: #{toy_lstm_forward.1} parent=1 // pred_check
      _
    $region15: #{toy_lstm_forward.1} parent=1 // pred_check_branch
      %22 = sbr.rel (0) target = $region17
    $region16: #{toy_lstm_forward.1} parent=1 // pred_region
      _
    $region17: #{toy_lstm_forward.1} parent=1 // pred_fallthru
      _
    // Predicated region
    $region18: #{toy_lstm_forward.1} parent=1 // pred_check
      _
    $region19: #{toy_lstm_forward.1} parent=1 // pred_check_branch
      %24 = sbr.rel (0) target = $region21
    $region20: #{toy_lstm_forward.1} parent=1 // pred_region
      _
    $region21: #{toy_lstm_forward.1} parent=1 // pred_fallthru
      _
    // Predicated region
    $region22: #{toy_lstm_forward.1} parent=1 // pred_check
      _
    $region23: #{toy_lstm_forward.1} parent=1 // pred_check_branch
      %26 = sbr.rel (0) target = $region25
    $region24: #{toy_lstm_forward.1} parent=1 // pred_region
      _
    $region25: #{toy_lstm_forward.1} parent=1 // pred_fallthru
      _
    // Predicated region
    $region26: #{toy_lstm_forward.1} parent=1 // pred_check
      _
    $region27: #{toy_lstm_forward.1} parent=1 // pred_check_branch
      %28 = sbr.rel (0) target = $region29
    $region28: #{toy_lstm_forward.1} parent=1 // pred_region
      _
    $region29: #{toy_lstm_forward.1} parent=1 // pred_fallthru
      _
    // Predicated region
    $region30: #{toy_lstm_forward.1} parent=1 // pred_check
      _
    $region31: #{toy_lstm_forward.1} parent=1 // pred_check_branch
      %30 = sbr.rel (0) target = $region33
    $region32: #{toy_lstm_forward.1} parent=1 // pred_region
      %s32 = ssub.s32 16, 16
      %33 = vsyncadd [#allocation3], %s32
      %s35 = sshll.u32 [#allocation2], 4
      %s36 = int_to_ptr.vmem [resolvable:$true] %s35
      %38 = dma.hbm_to_vmem [thread:$0]  %s7, 16, %s36, [#allocation3]
    $region33: #{toy_lstm_forward.1} parent=1 // pred_fallthru
      _
    // Predicated region
    $region34: #{toy_lstm_forward.1} parent=1 // pred_check
      _
    $region35: #{toy_lstm_forward.1} parent=1 // pred_check_branch
      %40 = sbr.rel (0) target = $region37
    $region36: #{toy_lstm_forward.1} parent=1 // pred_region
      %41 = dma.done [#allocation3], 16
    $region37: #{toy_lstm_forward.1} parent=1 // pred_fallthru
      _
    %v42 = vld [vmem:[%s0] sm:$0xff]
    %v43 = vld [vmem:[%s0 + $0x8] sm:$0xff]
    %v44 = vld [vmem:[%s1] sm:$0x7]
    %v45 = vld [vmem:[%s2] sm:$0x1]
    %v47 = vlaneseq
    %v48 = vshrl.u32 %v47, 7
    %v49 = vsub.s32 0, %v48
    %v50 = vrot.slane %v45, %v49
    %vm52 = vcmask 23552
    %v54 = vsel %vm52, %v42, 0
    %v57 = vsel %vm52, %v43, 0
    %vm59 = vcmask 1042432
    %v61 = vsel %vm59, %v44, 0
    %63 = vmatprep.subr.mxu0 0.0
    %64 = vmatpush1.msra.mxu0 %v61
    %65 = vmatprep.subr.mxu0 0.0
    %66 = vmatpush1.msra.mxu0 0.0
    %67 = vmatprep.subr.mxu0 0.0
    %68 = vmatpush1.msra.mxu0 0.0
    %69 = vmatprep.subr.mxu0 0.0
    %70 = vmatpush1.msra.mxu0 0.0
    %71 = vmatprep.subr.mxu0 0.0
    %72 = vmatpush1.msra.mxu0 0.0
    %73 = vmatprep.subr.mxu0 0.0
    %74 = vmatpush1.msra.mxu0 0.0
    %75 = vmatprep.subr.mxu0 0.0
    %76 = vmatpush1.msra.mxu0 0.0
    %77 = vmatprep.subr.mxu0 0.0
    %78 = vmatpush1.msra.mxu0 0.0
    %79 = vmatprep.subr.mxu0 0.0
    %80 = vmatpush1.msra.mxu0 0.0
    %81 = vmatprep.subr.mxu0 0.0
    %82 = vmatpush1.msra.mxu0 0.0
    %83 = vmatprep.subr.mxu0 0.0
    %84 = vmatpush1.msra.mxu0 0.0
    %85 = vmatprep.subr.mxu0 0.0
    %86 = vmatpush1.msra.mxu0 0.0
    %87 = vmatprep.subr.mxu0 0.0
    %88 = vmatpush1.msra.mxu0 0.0
    %89 = vmatprep.subr.mxu0 0.0
    %90 = vmatpush1.msra.mxu0 0.0
    %91 = vmatprep.subr.mxu0 0.0
    %92 = vmatpush1.msra.mxu0 0.0
    %93 = vmatprep.subr.mxu0 0.0
    %94 = vmatpush1.msra.mxu0 0.0
    %95 = vmatprep.subr.mxu0 0.0
    %96 = vmatpush1.msra.mxu0 0.0
    %97 = vmatprep.subr.mxu0 0.0
    %98 = vmatpush1.msra.mxu0 0.0
    %99 = vmatprep.subr.mxu0 0.0
    %100 = vmatpush1.msra.mxu0 0.0
    %101 = vmatprep.subr.mxu0 0.0
    %102 = vmatpush1.msra.mxu0 0.0
    %103 = vmatprep.subr.mxu0 0.0
    %104 = vmatpush1.msra.mxu0 0.0
    %105 = vmatprep.subr.mxu0 0.0
    %106 = vmatpush1.msra.mxu0 0.0
    %107 = vmatprep.subr.mxu0 0.0
    %108 = vmatpush1.msra.mxu0 0.0
    %109 = vmatprep.subr.mxu0 0.0
    %110 = vmatpush1.msra.mxu0 0.0
    %111 = vmatprep.subr.mxu0 0.0
    %112 = vmatpush1.msra.mxu0 0.0
    %113 = vmatprep.subr.mxu0 0.0
    %114 = vmatpush1.msra.mxu0 0.0
    %115 = vmatprep.subr.mxu0 0.0
    %116 = vmatpush1.msra.mxu0 0.0
    %117 = vmatprep.subr.mxu0 0.0
    %118 = vmatpush1.msra.mxu0 0.0
    %119 = vmatprep.subr.mxu0 0.0
    %120 = vmatpush1.msra.mxu0 0.0
    %121 = vmatprep.subr.mxu0 0.0
    %122 = vmatpush1.msra.mxu0 0.0
    %123 = vmatprep.subr.mxu0 0.0
    %124 = vmatpush1.msra.mxu0 0.0
    %125 = vmatprep.subr.mxu0 0.0
    %126 = vmatpush1.msra.mxu0 0.0
    %127 = vmatprep.mubr.f32.mxu0 0.0
    %128 = vmatmul.mubr.f32.gmra.mrb[0].mxu0 %v54
    %v129 = vpop.f32.mrb[0].mxu0
    %v130 = vadd.f32 %v50, %v129
    %v131 = vpop.f32.mrb[0].mxu0
    %132 = vmatprep.mubr.f32.mxu0 0.0
    %133 = vmatmul.mubr.f32.gmra.mrb[0].mxu0 %v57
    %v134 = vpop.f32.mrb[0].mxu0
    %v135 = vadd.f32 %v50, %v134
    %v136 = vpop.f32.mrb[0].mxu0
    %137 = vdwg.mxu0
    %v138 = vmax.f32 %v130, 0.0
    %v139 = vmax.f32 %v135, 0.0
    %v140 = vld [vmem:[%s3] sm:$0x3f]
    %v141 = vld [vmem:[%s5] sm:$0x1]
    %v143 = vlaneseq
    %v144 = vshrl.u32 %v143, 7
    %v145 = vsub.s32 0, %v144
    %v146 = vrot.slane %v141, %v145
    %vm148 = vcmask 48128
    %v150 = vsel %vm148, %v138, 0
    %v153 = vsel %vm148, %v139, 0
    %vm155 = vcmask 1045504
    %v157 = vsel %vm155, %v140, 0
    %159 = vmatprep.subr.mxu0 0.0
    %160 = vmatpush1.msra.mxu0 %v157
    %161 = vmatprep.subr.mxu0 0.0
    %162 = vmatpush1.msra.mxu0 0.0
    %163 = vmatprep.subr.mxu0 0.0
    %164 = vmatpush1.msra.mxu0 0.0
    %165 = vmatprep.subr.mxu0 0.0
    %166 = vmatpush1.msra.mxu0 0.0
    %167 = vmatprep.subr.mxu0 0.0
    %168 = vmatpush1.msra.mxu0 0.0
    %169 = vmatprep.subr.mxu0 0.0
    %170 = vmatpush1.msra.mxu0 0.0
    %171 = vmatprep.subr.mxu0 0.0
    %172 = vmatpush1.msra.mxu0 0.0
    %173 = vmatprep.subr.mxu0 0.0
    %174 = vmatpush1.msra.mxu0 0.0
    %175 = vmatprep.subr.mxu0 0.0
    %176 = vmatpush1.msra.mxu0 0.0
    %177 = vmatprep.subr.mxu0 0.0
    %178 = vmatpush1.msra.mxu0 0.0
    %179 = vmatprep.subr.mxu0 0.0
    %180 = vmatpush1.msra.mxu0 0.0
    %181 = vmatprep.subr.mxu0 0.0
    %182 = vmatpush1.msra.mxu0 0.0
    %183 = vmatprep.subr.mxu0 0.0
    %184 = vmatpush1.msra.mxu0 0.0
    %185 = vmatprep.subr.mxu0 0.0
    %186 = vmatpush1.msra.mxu0 0.0
    %187 = vmatprep.subr.mxu0 0.0
    %188 = vmatpush1.msra.mxu0 0.0
    %189 = vmatprep.subr.mxu0 0.0
    %190 = vmatpush1.msra.mxu0 0.0
    %191 = vmatprep.subr.mxu0 0.0
    %192 = vmatpush1.msra.mxu0 0.0
    %193 = vmatprep.subr.mxu0 0.0
    %194 = vmatpush1.msra.mxu0 0.0
    %195 = vmatprep.subr.mxu0 0.0
    %196 = vmatpush1.msra.mxu0 0.0
    %197 = vmatprep.subr.mxu0 0.0
    %198 = vmatpush1.msra.mxu0 0.0
    %199 = vmatprep.subr.mxu0 0.0
    %200 = vmatpush1.msra.mxu0 0.0
    %201 = vmatprep.subr.mxu0 0.0
    %202 = vmatpush1.msra.mxu0 0.0
    %203 = vmatprep.subr.mxu0 0.0
    %204 = vmatpush1.msra.mxu0 0.0
    %205 = vmatprep.subr.mxu0 0.0
    %206 = vmatpush1.msra.mxu0 0.0
    %207 = vmatprep.subr.mxu0 0.0
    %208 = vmatpush1.msra.mxu0 0.0
    %209 = vmatprep.subr.mxu0 0.0
    %210 = vmatpush1.msra.mxu0 0.0
    %211 = vmatprep.subr.mxu0 0.0
    %212 = vmatpush1.msra.mxu0 0.0
    %213 = vmatprep.subr.mxu0 0.0
    %214 = vmatpush1.msra.mxu0 0.0
    %215 = vmatprep.subr.mxu0 0.0
    %216 = vmatpush1.msra.mxu0 0.0
    %217 = vmatprep.subr.mxu0 0.0
    %218 = vmatpush1.msra.mxu0 0.0
    %219 = vmatprep.subr.mxu0 0.0
    %220 = vmatpush1.msra.mxu0 0.0
    %221 = vmatprep.subr.mxu0 0.0
    %222 = vmatpush1.msra.mxu0 0.0
    %223 = vmatprep.mubr.f32.mxu0 0.0
    %224 = vmatmul.mubr.f32.gmra.mrb[0].mxu0 %v150
    %v225 = vpop.f32.mrb[0].mxu0
    %v226 = vadd.f32 %v146, %v225
    %v227 = vpop.f32.mrb[0].mxu0
    %228 = vmatprep.mubr.f32.mxu0 0.0
    %229 = vmatmul.mubr.f32.gmra.mrb[0].mxu0 %v153
    %v230 = vpop.f32.mrb[0].mxu0
    %v231 = vadd.f32 %v146, %v230
    %v232 = vpop.f32.mrb[0].mxu0
    %233 = vdwg.mxu0
    %v234 = vld [vmem:[%s4] sm:$0x3f]
    %v235 = vld [vmem:[%s6] sm:$0x3f]
    %v236 = vld [vmem:[#allocation2] sm:$0x1]
    %v237 = vlaneseq
    %v238 = vshrl.u32 %v237, 7
    %v239 = vsub.s32 0, %v238
    %v240 = vrot.slane %v234, %v239
    %v241 = vmul.f32 %v240, 0.0
    %v242 = vlaneseq
    %v243 = vshrl.u32 %v242, 7
    %v244 = vsub.s32 1, %v243
    %v245 = vrot.slane %v234, %v244
    %v246 = vmul.f32 %v245, 0.0
    %v247 = vlaneseq
    %v248 = vshrl.u32 %v247, 7
    %v249 = vsub.s32 2, %v248
    %v250 = vrot.slane %v234, %v249
    %v251 = vmul.f32 %v250, 0.0
    %v252 = vlaneseq
    %v253 = vshrl.u32 %v252, 7
    %v254 = vsub.s32 3, %v253
    %v255 = vrot.slane %v234, %v254
    %v256 = vmul.f32 %v255, 0.0
    %v257 = vlaneseq
    %v258 = vshrl.u32 %v257, 7
    %v259 = vsub.s32 4, %v258
    %v260 = vrot.slane %v234, %v259
    %v261 = vmul.f32 %v260, 0.0
    %v262 = vlaneseq
    %v263 = vshrl.u32 %v262, 7
    %v264 = vsub.s32 5, %v263
    %v265 = vrot.slane %v234, %v264
    %v266 = vmul.f32 %v265, 0.0
    %v267 = vadd.f32 %v226, %v241
    %v268 = vadd.f32 %v231, %v241
    %v269 = vadd.f32 %v246, %v251
    %v270 = vadd.f32 %v256, %v261
    %v271 = vadd.f32 %v267, %v269
    %v272 = vadd.f32 %v268, %v269
    %v273 = vadd.f32 %v270, %v266
    %v274 = vadd.f32 %v271, %v273
    %v275 = vadd.f32 %v272, %v273
    %v276 = vmul.f32 %v274, 0.5
    %v277 = vmul.f32 %v275, 0.5
    %v278 = vtanh.pop %v276
    %v279 = vtanh.pop %v277
    %v280 = vmul.f32 %v278, 0.5
    %v281 = vmul.f32 %v279, 0.5
    %v282 = vadd.f32 %v280, 0.5
    %v283 = vadd.f32 %v281, 0.5
    %v284 = vtanh.pop %v274
    %v285 = vtanh.pop %v275
    %v286 = vmul.f32 %v282, 0.0
    %v287 = vmul.f32 %v283, 0.0
    %290 = vrot.lane.b32.xlu0 %v284, 116
    %v291 = vpop.permute.xlu0 %290
    %292 = vrot.lane.b32.xlu0 %v285, 116
    %v293 = vpop.permute.xlu0 %292
    %v296 = vmul.f32 %v282, %v291
    %v297 = vmul.f32 %v283, %v293
    %300 = vrot.lane.b32.xlu0 %v296, 6
    %v301 = vpop.permute.xlu0 %300
    %302 = vrot.lane.b32.xlu0 %v297, 6
    %v303 = vpop.permute.xlu0 %302
    %v306 = vadd.f32 %v286, %v301
    %v307 = vadd.f32 %v287, %v303
    %v308 = vtanh.pop %v306
    %v309 = vtanh.pop %v307
    %312 = vrot.lane.b32.xlu0 %v308, 12
    %v313 = vpop.permute.xlu0 %312
    %314 = vrot.lane.b32.xlu0 %v309, 12
    %v315 = vpop.permute.xlu0 %314
    %v318 = vmul.f32 %v282, %v313
    %v319 = vmul.f32 %v283, %v315
    %v321 = vlaneseq
    %v322 = vshrl.u32 %v321, 7
    %v323 = vsub.s32 0, %v322
    %v324 = vrot.slane %v236, %v323
    %v328 = vrot.slane %v319, 7
    %vm329 = vcmask 1041409
    %v330 = vsel %vm329, %v328, %v318
    %331 = vrot.lane.b32.xlu0 %v330, 110
    %v332 = vpop.permute.xlu0 %331
    %v333 = vsel %vm148, %v332, 0
    %v336 = vsel %vm155, %v235, 0
    %338 = vmatprep.subr.mxu0 0.0
    %339 = vmatpush1.msra.mxu0 %v336
    %340 = vmatprep.subr.mxu0 0.0
    %341 = vmatpush1.msra.mxu0 0.0
    %342 = vmatprep.subr.mxu0 0.0
    %343 = vmatpush1.msra.mxu0 0.0
    %344 = vmatprep.subr.mxu0 0.0
    %345 = vmatpush1.msra.mxu0 0.0
    %346 = vmatprep.subr.mxu0 0.0
    %347 = vmatpush1.msra.mxu0 0.0
    %348 = vmatprep.subr.mxu0 0.0
    %349 = vmatpush1.msra.mxu0 0.0
    %350 = vmatprep.subr.mxu0 0.0
    %351 = vmatpush1.msra.mxu0 0.0
    %352 = vmatprep.subr.mxu0 0.0
    %353 = vmatpush1.msra.mxu0 0.0
    %354 = vmatprep.subr.mxu0 0.0
    %355 = vmatpush1.msra.mxu0 0.0
    %356 = vmatprep.subr.mxu0 0.0
    %357 = vmatpush1.msra.mxu0 0.0
    %358 = vmatprep.subr.mxu0 0.0
    %359 = vmatpush1.msra.mxu0 0.0
    %360 = vmatprep.subr.mxu0 0.0
    %361 = vmatpush1.msra.mxu0 0.0
    %362 = vmatprep.subr.mxu0 0.0
    %363 = vmatpush1.msra.mxu0 0.0
    %364 = vmatprep.subr.mxu0 0.0
    %365 = vmatpush1.msra.mxu0 0.0
    %366 = vmatprep.subr.mxu0 0.0
    %367 = vmatpush1.msra.mxu0 0.0
    %368 = vmatprep.subr.mxu0 0.0
    %369 = vmatpush1.msra.mxu0 0.0
    %370 = vmatprep.subr.mxu0 0.0
    %371 = vmatpush1.msra.mxu0 0.0
    %372 = vmatprep.subr.mxu0 0.0
    %373 = vmatpush1.msra.mxu0 0.0
    %374 = vmatprep.subr.mxu0 0.0
    %375 = vmatpush1.msra.mxu0 0.0
    %376 = vmatprep.subr.mxu0 0.0
    %377 = vmatpush1.msra.mxu0 0.0
    %378 = vmatprep.subr.mxu0 0.0
    %379 = vmatpush1.msra.mxu0 0.0
    %380 = vmatprep.subr.mxu0 0.0
    %381 = vmatpush1.msra.mxu0 0.0
    %382 = vmatprep.subr.mxu0 0.0
    %383 = vmatpush1.msra.mxu0 0.0
    %384 = vmatprep.subr.mxu0 0.0
    %385 = vmatpush1.msra.mxu0 0.0
    %386 = vmatprep.subr.mxu0 0.0
    %387 = vmatpush1.msra.mxu0 0.0
    %388 = vmatprep.subr.mxu0 0.0
    %389 = vmatpush1.msra.mxu0 0.0
    %390 = vmatprep.subr.mxu0 0.0
    %391 = vmatpush1.msra.mxu0 0.0
    %392 = vmatprep.subr.mxu0 0.0
    %393 = vmatpush1.msra.mxu0 0.0
    %394 = vmatprep.subr.mxu0 0.0
    %395 = vmatpush1.msra.mxu0 0.0
    %396 = vmatprep.subr.mxu0 0.0
    %397 = vmatpush1.msra.mxu0 0.0
    %398 = vmatprep.subr.mxu0 0.0
    %399 = vmatpush1.msra.mxu0 0.0
    %400 = vmatprep.subr.mxu0 0.0
    %401 = vmatpush1.msra.mxu0 0.0
    %402 = vmatprep.mubr.f32.mxu0 0.0
    %403 = vmatmul.mubr.f32.gmra.mrb[0].mxu0 %v333
    %v404 = vpop.f32.mrb[0].mxu0
    %v405 = vadd.f32 %v324, %v404
    %v406 = vpop.f32.mrb[0].mxu0
    %407 = vdwg.mxu0
    %v410 = vunpack.c.l.s4 1966171168
    %v411 = vunpack.c.0.s8 %v410
    %v412 = vlaneseq
    %v413 = vshrl.u32 %v412, 7
    %v414 = vsub.s32 %v411, %v413
    %v415 = vrot.slane %v405, %v414
    %v416 = vcombine.high %v415, %v415
    %v418 = vunpack.c.l.s4 1966171168
    %v419 = vunpack.c.0.s8 %v418
    %v420 = vlaneseq
    %v421 = vshrl.u32 %v420, 7
    %v422 = vsub.s32 %v419, %v421
    %v423 = vrot.slane %v415, %v422
    %v425 = vunpack.c.l.s4 1966171168
    %v426 = vunpack.c.0.s8 %v425
    %v427 = vlaneseq
    %v428 = vshrl.u32 %v427, 7
    %v429 = vsub.s32 %v426, %v428
    %v430 = vrot.slane %v416, %v429
    %vm433 = vcmask 57344
    %434 = vst.msk [vmem:[#allocation5] sm:$0x1] %vm433, %v423
    %435 = vst.msk [vmem:[#allocation5 + $0x8] sm:$0x1] %vm433, %v430
    %436 = vset.pattern.permute.xlu0 18
    %437 = vperm.xlu0 %436, %v318
    %v438 = vpop.permute.xlu0 %437
    %440 = vset.pattern.permute.xlu0 18
    %441 = vperm.xlu0 %440, %v319
    %v442 = vpop.permute.xlu0 %441
    %v444 = vmul.f32 %v438, %v240
    %v445 = vmul.f32 %v442, %v240
    %446 = vset.pattern.permute.xlu0 19
    %447 = vperm.xlu0 %446, %v318
    %v448 = vpop.permute.xlu0 %447
    %450 = vset.pattern.permute.xlu0 19
    %451 = vperm.xlu0 %450, %v319
    %v452 = vpop.permute.xlu0 %451
    %v454 = vmul.f32 %v448, %v245
    %v455 = vmul.f32 %v452, %v245
    %456 = vset.pattern.permute.xlu0 20
    %457 = vperm.xlu0 %456, %v318
    %v458 = vpop.permute.xlu0 %457
    %460 = vset.pattern.permute.xlu0 20
    %461 = vperm.xlu0 %460, %v319
    %v462 = vpop.permute.xlu0 %461
    %v464 = vmul.f32 %v458, %v250
    %v465 = vmul.f32 %v462, %v250
    %466 = vset.pattern.permute.xlu0 21
    %467 = vperm.xlu0 %466, %v318
    %v468 = vpop.permute.xlu0 %467
    %470 = vset.pattern.permute.xlu0 21
    %471 = vperm.xlu0 %470, %v319
    %v472 = vpop.permute.xlu0 %471
    %v474 = vmul.f32 %v468, %v255
    %v475 = vmul.f32 %v472, %v255
    %476 = vset.pattern.permute.xlu0 22
    %477 = vperm.xlu0 %476, %v318
    %v478 = vpop.permute.xlu0 %477
    %480 = vset.pattern.permute.xlu0 22
    %481 = vperm.xlu0 %480, %v319
    %v482 = vpop.permute.xlu0 %481
    %v484 = vmul.f32 %v478, %v260
    %v485 = vmul.f32 %v482, %v260
    %486 = vset.pattern.permute.xlu0 23
    %487 = vperm.xlu0 %486, %v318
    %v488 = vpop.permute.xlu0 %487
    %490 = vset.pattern.permute.xlu0 23
    %491 = vperm.xlu0 %490, %v319
    %v492 = vpop.permute.xlu0 %491
    %v494 = vmul.f32 %v488, %v265
    %v495 = vmul.f32 %v492, %v265
    %v498 = vrot.slane %v444, 7
    %v499 = vrot.slane %v445, 7
    %v502 = vadd.f32 %v226, %v498
    %v503 = vadd.f32 %v231, %v499
    %v504 = vadd.f32 %v454, %v464
    %v505 = vadd.f32 %v455, %v465
    %v506 = vadd.f32 %v474, %v484
    %v507 = vadd.f32 %v475, %v485
    %v510 = vrot.slane %v504, 7
    %v511 = vrot.slane %v505, 7
    %v514 = vadd.f32 %v502, %v510
    %v515 = vadd.f32 %v503, %v511
    %v516 = vadd.f32 %v506, %v494
    %v517 = vadd.f32 %v507, %v495
    %v520 = vrot.slane %v516, 7
    %v521 = vrot.slane %v517, 7
    %v524 = vadd.f32 %v514, %v520
    %v525 = vadd.f32 %v515, %v521
    %v526 = vmul.f32 %v524, 0.5
    %v527 = vmul.f32 %v525, 0.5
    %v528 = vtanh.pop %v526
    %v529 = vtanh.pop %v527
    %v530 = vmul.f32 %v528, 0.5
    %v531 = vmul.f32 %v529, 0.5
    %v532 = vadd.f32 %v530, 0.5
    %v533 = vadd.f32 %v531, 0.5
    %v534 = vtanh.pop %v524
    %v535 = vtanh.pop %v525
    %v538 = vrot.slane %v306, 7
    %v539 = vrot.slane %v307, 7
    %v542 = vmul.f32 %v532, %v538
    %v543 = vmul.f32 %v533, %v539
    %546 = vrot.lane.b32.xlu0 %v534, 116
    %v547 = vpop.permute.xlu0 %546
    %548 = vrot.lane.b32.xlu0 %v535, 116
    %v549 = vpop.permute.xlu0 %548
    %v552 = vmul.f32 %v532, %v547
    %v553 = vmul.f32 %v533, %v549
    %556 = vrot.lane.b32.xlu0 %v552, 6
    %v557 = vpop.permute.xlu0 %556
    %558 = vrot.lane.b32.xlu0 %v553, 6
    %v559 = vpop.permute.xlu0 %558
    %v562 = vadd.f32 %v542, %v557
    %v563 = vadd.f32 %v543, %v559
    %v564 = vtanh.pop %v562
    %v565 = vtanh.pop %v563
    %568 = vrot.lane.b32.xlu0 %v564, 12
    %v569 = vpop.permute.xlu0 %568
    %570 = vrot.lane.b32.xlu0 %v565, 12
    %v571 = vpop.permute.xlu0 %570
    %v574 = vmul.f32 %v532, %v569
    %v575 = vmul.f32 %v533, %v571
    %v578 = vrot.slane %v574, 1
    %v579 = vsel %vm329, %v575, %v578
    %580 = vrot.lane.b32.xlu0 %v579, 110
    %v581 = vpop.permute.xlu0 %580
    %v582 = vsel %vm148, %v581, 0
    %584 = vmatprep.subr.mxu0 0.0
    %585 = vmatpush1.msra.mxu0 %v336
    %586 = vmatprep.subr.mxu0 0.0
    %587 = vmatpush1.msra.mxu0 0.0
    %588 = vmatprep.subr.mxu0 0.0
    %589 = vmatpush1.msra.mxu0 0.0
    %590 = vmatprep.subr.mxu0 0.0
    %591 = vmatpush1.msra.mxu0 0.0
    %592 = vmatprep.subr.mxu0 0.0
    %593 = vmatpush1.msra.mxu0 0.0
    %594 = vmatprep.subr.mxu0 0.0
    %595 = vmatpush1.msra.mxu0 0.0
    %596 = vmatprep.subr.mxu0 0.0
    %597 = vmatpush1.msra.mxu0 0.0
    %598 = vmatprep.subr.mxu0 0.0
    %599 = vmatpush1.msra.mxu0 0.0
    %600 = vmatprep.subr.mxu0 0.0
    %601 = vmatpush1.msra.mxu0 0.0
    %602 = vmatprep.subr.mxu0 0.0
    %603 = vmatpush1.msra.mxu0 0.0
    %604 = vmatprep.subr.mxu0 0.0
    %605 = vmatpush1.msra.mxu0 0.0
    %606 = vmatprep.subr.mxu0 0.0
    %607 = vmatpush1.msra.mxu0 0.0
    %608 = vmatprep.subr.mxu0 0.0
    %609 = vmatpush1.msra.mxu0 0.0
    %610 = vmatprep.subr.mxu0 0.0
    %611 = vmatpush1.msra.mxu0 0.0
    %612 = vmatprep.subr.mxu0 0.0
    %613 = vmatpush1.msra.mxu0 0.0
    %614 = vmatprep.subr.mxu0 0.0
    %615 = vmatpush1.msra.mxu0 0.0
    %616 = vmatprep.subr.mxu0 0.0
    %617 = vmatpush1.msra.mxu0 0.0
    %618 = vmatprep.subr.mxu0 0.0
    %619 = vmatpush1.msra.mxu0 0.0
    %620 = vmatprep.subr.mxu0 0.0
    %621 = vmatpush1.msra.mxu0 0.0
    %622 = vmatprep.subr.mxu0 0.0
    %623 = vmatpush1.msra.mxu0 0.0
    %624 = vmatprep.subr.mxu0 0.0
    %625 = vmatpush1.msra.mxu0 0.0
    %626 = vmatprep.subr.mxu0 0.0
    %627 = vmatpush1.msra.mxu0 0.0
    %628 = vmatprep.subr.mxu0 0.0
    %629 = vmatpush1.msra.mxu0 0.0
    %630 = vmatprep.subr.mxu0 0.0
    %631 = vmatpush1.msra.mxu0 0.0
    %632 = vmatprep.subr.mxu0 0.0
    %633 = vmatpush1.msra.mxu0 0.0
    %634 = vmatprep.subr.mxu0 0.0
    %635 = vmatpush1.msra.mxu0 0.0
    %636 = vmatprep.subr.mxu0 0.0
    %637 = vmatpush1.msra.mxu0 0.0
    %638 = vmatprep.subr.mxu0 0.0
    %639 = vmatpush1.msra.mxu0 0.0
    %640 = vmatprep.subr.mxu0 0.0
    %641 = vmatpush1.msra.mxu0 0.0
    %642 = vmatprep.subr.mxu0 0.0
    %643 = vmatpush1.msra.mxu0 0.0
    %644 = vmatprep.subr.mxu0 0.0
    %645 = vmatpush1.msra.mxu0 0.0
    %646 = vmatprep.subr.mxu0 0.0
    %647 = vmatpush1.msra.mxu0 0.0
    %648 = vmatprep.mubr.f32.mxu0 0.0
    %649 = vmatmul.mubr.f32.gmra.mrb[0].mxu0 %v582
    %v650 = vpop.f32.mrb[0].mxu0
    %v651 = vadd.f32 %v324, %v650
    %v652 = vpop.f32.mrb[0].mxu0
    %653 = vdwg.mxu0
    %v656 = vunpack.c.l.s4 1966171168
    %v657 = vunpack.c.0.s8 %v656
    %v658 = vlaneseq
    %v659 = vshrl.u32 %v658, 7
    %v660 = vsub.s32 %v657, %v659
    %v661 = vrot.slane %v651, %v660
    %v662 = vcombine.high %v661, %v661
    %v664 = vunpack.c.l.s4 1966171168
    %v665 = vunpack.c.0.s8 %v664
    %v666 = vlaneseq
    %v667 = vshrl.u32 %v666, 7
    %v668 = vsub.s32 %v665, %v667
    %v669 = vrot.slane %v661, %v668
    %v671 = vunpack.c.l.s4 1966171168
    %v672 = vunpack.c.0.s8 %v671
    %v673 = vlaneseq
    %v674 = vshrl.u32 %v673, 7
    %v675 = vsub.s32 %v672, %v674
    %v676 = vrot.slane %v662, %v675
    %679 = vst.msk [vmem:[#allocation5 + $0x1] sm:$0x1] %vm433, %v669
    %680 = vst.msk [vmem:[#allocation5 + $0x9] sm:$0x1] %vm433, %v676
    %681 = vset.pattern.permute.xlu0 18
    %682 = vperm.xlu0 %681, %v574
    %v683 = vpop.permute.xlu0 %682
    %685 = vset.pattern.permute.xlu0 18
    %686 = vperm.xlu0 %685, %v575
    %v687 = vpop.permute.xlu0 %686
    %v689 = vmul.f32 %v683, %v240
    %v690 = vmul.f32 %v687, %v240
    %691 = vset.pattern.permute.xlu0 19
    %692 = vperm.xlu0 %691, %v574
    %v693 = vpop.permute.xlu0 %692
    %695 = vset.pattern.permute.xlu0 19
    %696 = vperm.xlu0 %695, %v575
    %v697 = vpop.permute.xlu0 %696
    %v699 = vmul.f32 %v693, %v245
    %v700 = vmul.f32 %v697, %v245
    %701 = vset.pattern.permute.xlu0 20
    %702 = vperm.xlu0 %701, %v574
    %v703 = vpop.permute.xlu0 %702
    %705 = vset.pattern.permute.xlu0 20
    %706 = vperm.xlu0 %705, %v575
    %v707 = vpop.permute.xlu0 %706
    %v709 = vmul.f32 %v703, %v250
    %v710 = vmul.f32 %v707, %v250
    %711 = vset.pattern.permute.xlu0 21
    %712 = vperm.xlu0 %711, %v574
    %v713 = vpop.permute.xlu0 %712
    %715 = vset.pattern.permute.xlu0 21
    %716 = vperm.xlu0 %715, %v575
    %v717 = vpop.permute.xlu0 %716
    %v719 = vmul.f32 %v713, %v255
    %v720 = vmul.f32 %v717, %v255
    %721 = vset.pattern.permute.xlu0 22
    %722 = vperm.xlu0 %721, %v574
    %v723 = vpop.permute.xlu0 %722
    %725 = vset.pattern.permute.xlu0 22
    %726 = vperm.xlu0 %725, %v575
    %v727 = vpop.permute.xlu0 %726
    %v729 = vmul.f32 %v723, %v260
    %v730 = vmul.f32 %v727, %v260
    %731 = vset.pattern.permute.xlu0 23
    %732 = vperm.xlu0 %731, %v574
    %v733 = vpop.permute.xlu0 %732
    %735 = vset.pattern.permute.xlu0 23
    %736 = vperm.xlu0 %735, %v575
    %v737 = vpop.permute.xlu0 %736
    %v739 = vmul.f32 %v733, %v265
    %v740 = vmul.f32 %v737, %v265
    %v743 = vrot.slane %v689, 7
    %v744 = vrot.slane %v690, 7
    %v747 = vadd.f32 %v226, %v743
    %v748 = vadd.f32 %v231, %v744
    %v749 = vadd.f32 %v699, %v709
    %v750 = vadd.f32 %v700, %v710
    %v751 = vadd.f32 %v719, %v729
    %v752 = vadd.f32 %v720, %v730
    %v755 = vrot.slane %v749, 7
    %v756 = vrot.slane %v750, 7
    %v759 = vadd.f32 %v747, %v755
    %v760 = vadd.f32 %v748, %v756
    %v761 = vadd.f32 %v751, %v739
    %v762 = vadd.f32 %v752, %v740
    %v765 = vrot.slane %v761, 7
    %v766 = vrot.slane %v762, 7
    %v769 = vadd.f32 %v759, %v765
    %v770 = vadd.f32 %v760, %v766
    %v771 = vmul.f32 %v769, 0.5
    %v772 = vmul.f32 %v770, 0.5
    %v773 = vtanh.pop %v771
    %v774 = vtanh.pop %v772
    %v775 = vmul.f32 %v773, 0.5
    %v776 = vmul.f32 %v774, 0.5
    %v777 = vadd.f32 %v775, 0.5
    %v778 = vadd.f32 %v776, 0.5
    %v779 = vtanh.pop %v769
    %v780 = vtanh.pop %v770
    %v783 = vrot.slane %v562, 7
    %v784 = vrot.slane %v563, 7
    %v787 = vmul.f32 %v777, %v783
    %v788 = vmul.f32 %v778, %v784
    %791 = vrot.lane.b32.xlu0 %v779, 116
    %v792 = vpop.permute.xlu0 %791
    %793 = vrot.lane.b32.xlu0 %v780, 116
    %v794 = vpop.permute.xlu0 %793
    %v797 = vmul.f32 %v777, %v792
    %v798 = vmul.f32 %v778, %v794
    %801 = vrot.lane.b32.xlu0 %v797, 6
    %v802 = vpop.permute.xlu0 %801
    %803 = vrot.lane.b32.xlu0 %v798, 6
    %v804 = vpop.permute.xlu0 %803
    %v807 = vadd.f32 %v787, %v802
    %v808 = vadd.f32 %v788, %v804
    %v809 = vtanh.pop %v807
    %v810 = vtanh.pop %v808
    %813 = vrot.lane.b32.xlu0 %v809, 12
    %v814 = vpop.permute.xlu0 %813
    %815 = vrot.lane.b32.xlu0 %v810, 12
    %v816 = vpop.permute.xlu0 %815
    %v819 = vmul.f32 %v777, %v814
    %v820 = vmul.f32 %v778, %v816
    %v823 = vrot.slane %v819, 2
    %v824 = vrot.slane %v820, 1
    %v825 = vsel %vm329, %v824, %v823
    %826 = vrot.lane.b32.xlu0 %v825, 110
    %v827 = vpop.permute.xlu0 %826
    %v828 = vsel %vm148, %v827, 0
    %830 = vmatprep.subr.mxu0 0.0
    %831 = vmatpush1.msra.mxu0 %v336
    %832 = vmatprep.subr.mxu0 0.0
    %833 = vmatpush1.msra.mxu0 0.0
    %834 = vmatprep.subr.mxu0 0.0
    %835 = vmatpush1.msra.mxu0 0.0
    %836 = vmatprep.subr.mxu0 0.0
    %837 = vmatpush1.msra.mxu0 0.0
    %838 = vmatprep.subr.mxu0 0.0
    %839 = vmatpush1.msra.mxu0 0.0
    %840 = vmatprep.subr.mxu0 0.0
    %841 = vmatpush1.msra.mxu0 0.0
    %842 = vmatprep.subr.mxu0 0.0
    %843 = vmatpush1.msra.mxu0 0.0
    %844 = vmatprep.subr.mxu0 0.0
    %845 = vmatpush1.msra.mxu0 0.0
    %846 = vmatprep.subr.mxu0 0.0
    %847 = vmatpush1.msra.mxu0 0.0
    %848 = vmatprep.subr.mxu0 0.0
    %849 = vmatpush1.msra.mxu0 0.0
    %850 = vmatprep.subr.mxu0 0.0
    %851 = vmatpush1.msra.mxu0 0.0
    %852 = vmatprep.subr.mxu0 0.0
    %853 = vmatpush1.msra.mxu0 0.0
    %854 = vmatprep.subr.mxu0 0.0
    %855 = vmatpush1.msra.mxu0 0.0
    %856 = vmatprep.subr.mxu0 0.0
    %857 = vmatpush1.msra.mxu0 0.0
    %858 = vmatprep.subr.mxu0 0.0
    %859 = vmatpush1.msra.mxu0 0.0
    %860 = vmatprep.subr.mxu0 0.0
    %861 = vmatpush1.msra.mxu0 0.0
    %862 = vmatprep.subr.mxu0 0.0
    %863 = vmatpush1.msra.mxu0 0.0
    %864 = vmatprep.subr.mxu0 0.0
    %865 = vmatpush1.msra.mxu0 0.0
    %866 = vmatprep.subr.mxu0 0.0
    %867 = vmatpush1.msra.mxu0 0.0
    %868 = vmatprep.subr.mxu0 0.0
    %869 = vmatpush1.msra.mxu0 0.0
    %870 = vmatprep.subr.mxu0 0.0
    %871 = vmatpush1.msra.mxu0 0.0
    %872 = vmatprep.subr.mxu0 0.0
    %873 = vmatpush1.msra.mxu0 0.0
    %874 = vmatprep.subr.mxu0 0.0
    %875 = vmatpush1.msra.mxu0 0.0
    %876 = vmatprep.subr.mxu0 0.0
    %877 = vmatpush1.msra.mxu0 0.0
    %878 = vmatprep.subr.mxu0 0.0
    %879 = vmatpush1.msra.mxu0 0.0
    %880 = vmatprep.subr.mxu0 0.0
    %881 = vmatpush1.msra.mxu0 0.0
    %882 = vmatprep.subr.mxu0 0.0
    %883 = vmatpush1.msra.mxu0 0.0
    %884 = vmatprep.subr.mxu0 0.0
    %885 = vmatpush1.msra.mxu0 0.0
    %886 = vmatprep.subr.mxu0 0.0
    %887 = vmatpush1.msra.mxu0 0.0
    %888 = vmatprep.subr.mxu0 0.0
    %889 = vmatpush1.msra.mxu0 0.0
    %890 = vmatprep.subr.mxu0 0.0
    %891 = vmatpush1.msra.mxu0 0.0
    %892 = vmatprep.subr.mxu0 0.0
    %893 = vmatpush1.msra.mxu0 0.0
    %894 = vmatprep.mubr.f32.mxu0 0.0
    %895 = vmatmul.mubr.f32.gmra.mrb[0].mxu0 %v828
    %v896 = vpop.f32.mrb[0].mxu0
    %v897 = vadd.f32 %v324, %v896
    %v898 = vpop.f32.mrb[0].mxu0
    %899 = vdwg.mxu0
    %v902 = vunpack.c.l.s4 1966171168
    %v903 = vunpack.c.0.s8 %v902
    %v904 = vlaneseq
    %v905 = vshrl.u32 %v904, 7
    %v906 = vsub.s32 %v903, %v905
    %v907 = vrot.slane %v897, %v906
    %v908 = vcombine.high %v907, %v907
    %v910 = vunpack.c.l.s4 1966171168
    %v911 = vunpack.c.0.s8 %v910
    %v912 = vlaneseq
    %v913 = vshrl.u32 %v912, 7
    %v914 = vsub.s32 %v911, %v913
    %v915 = vrot.slane %v907, %v914
    %v917 = vunpack.c.l.s4 1966171168
    %v918 = vunpack.c.0.s8 %v917
    %v919 = vlaneseq
    %v920 = vshrl.u32 %v919, 7
    %v921 = vsub.s32 %v918, %v920
    %v922 = vrot.slane %v908, %v921
    %925 = vst.msk [vmem:[#allocation5 + $0x2] sm:$0x1] %vm433, %v915
    %926 = vst.msk [vmem:[#allocation5 + $0xa] sm:$0x1] %vm433, %v922
    %927 = vset.pattern.permute.xlu0 18
    %928 = vperm.xlu0 %927, %v819
    %v929 = vpop.permute.xlu0 %928
    %931 = vset.pattern.permute.xlu0 18
    %932 = vperm.xlu0 %931, %v820
    %v933 = vpop.permute.xlu0 %932
    %v935 = vmul.f32 %v929, %v240
    %v936 = vmul.f32 %v933, %v240
    %937 = vset.pattern.permute.xlu0 19
    %938 = vperm.xlu0 %937, %v819
    %v939 = vpop.permute.xlu0 %938
    %941 = vset.pattern.permute.xlu0 19
    %942 = vperm.xlu0 %941, %v820
    %v943 = vpop.permute.xlu0 %942
    %v945 = vmul.f32 %v939, %v245
    %v946 = vmul.f32 %v943, %v245
    %947 = vset.pattern.permute.xlu0 20
    %948 = vperm.xlu0 %947, %v819
    %v949 = vpop.permute.xlu0 %948
    %951 = vset.pattern.permute.xlu0 20
    %952 = vperm.xlu0 %951, %v820
    %v953 = vpop.permute.xlu0 %952
    %v955 = vmul.f32 %v949, %v250
    %v956 = vmul.f32 %v953, %v250
    %957 = vset.pattern.permute.xlu0 21
    %958 = vperm.xlu0 %957, %v819
    %v959 = vpop.permute.xlu0 %958
    %961 = vset.pattern.permute.xlu0 21
    %962 = vperm.xlu0 %961, %v820
    %v963 = vpop.permute.xlu0 %962
    %v965 = vmul.f32 %v959, %v255
    %v966 = vmul.f32 %v963, %v255
    %967 = vset.pattern.permute.xlu0 22
    %968 = vperm.xlu0 %967, %v819
    %v969 = vpop.permute.xlu0 %968
    %971 = vset.pattern.permute.xlu0 22
    %972 = vperm.xlu0 %971, %v820
    %v973 = vpop.permute.xlu0 %972
    %v975 = vmul.f32 %v969, %v260
    %v976 = vmul.f32 %v973, %v260
    %977 = vset.pattern.permute.xlu0 23
    %978 = vperm.xlu0 %977, %v819
    %v979 = vpop.permute.xlu0 %978
    %981 = vset.pattern.permute.xlu0 23
    %982 = vperm.xlu0 %981, %v820
    %v983 = vpop.permute.xlu0 %982
    %v985 = vmul.f32 %v979, %v265
    %v986 = vmul.f32 %v983, %v265
    %v989 = vrot.slane %v935, 7
    %v990 = vrot.slane %v936, 7
    %v993 = vadd.f32 %v226, %v989
    %v994 = vadd.f32 %v231, %v990
    %v995 = vadd.f32 %v945, %v955
    %v996 = vadd.f32 %v946, %v956
    %v997 = vadd.f32 %v965, %v975
    %v998 = vadd.f32 %v966, %v976
    %v1001 = vrot.slane %v995, 7
    %v1002 = vrot.slane %v996, 7
    %v1005 = vadd.f32 %v993, %v1001
    %v1006 = vadd.f32 %v994, %v1002
    %v1007 = vadd.f32 %v997, %v985
    %v1008 = vadd.f32 %v998, %v986
    %v1011 = vrot.slane %v1007, 7
    %v1012 = vrot.slane %v1008, 7
    %v1015 = vadd.f32 %v1005, %v1011
    %v1016 = vadd.f32 %v1006, %v1012
    %v1017 = vmul.f32 %v1015, 0.5
    %v1018 = vmul.f32 %v1016, 0.5
    %v1019 = vtanh.pop %v1017
    %v1020 = vtanh.pop %v1018
    %v1021 = vmul.f32 %v1019, 0.5
    %v1022 = vmul.f32 %v1020, 0.5
    %v1023 = vadd.f32 %v1021, 0.5
    %v1024 = vadd.f32 %v1022, 0.5
    %v1025 = vtanh.pop %v1015
    %v1026 = vtanh.pop %v1016
    %v1029 = vrot.slane %v807, 7
    %v1030 = vrot.slane %v808, 7
    %v1033 = vmul.f32 %v1023, %v1029
    %v1034 = vmul.f32 %v1024, %v1030
    %1037 = vrot.lane.b32.xlu0 %v1025, 116
    %v1038 = vpop.permute.xlu0 %1037
    %1039 = vrot.lane.b32.xlu0 %v1026, 116
    %v1040 = vpop.permute.xlu0 %1039
    %v1043 = vmul.f32 %v1023, %v1038
    %v1044 = vmul.f32 %v1024, %v1040
    %1047 = vrot.lane.b32.xlu0 %v1043, 6
    %v1048 = vpop.permute.xlu0 %1047
    %1049 = vrot.lane.b32.xlu0 %v1044, 6
    %v1050 = vpop.permute.xlu0 %1049
    %v1053 = vadd.f32 %v1033, %v1048
    %v1054 = vadd.f32 %v1034, %v1050
    %v1055 = vtanh.pop %v1053
    %v1056 = vtanh.pop %v1054
    %1059 = vrot.lane.b32.xlu0 %v1055, 12
    %v1060 = vpop.permute.xlu0 %1059
    %1061 = vrot.lane.b32.xlu0 %v1056, 12
    %v1062 = vpop.permute.xlu0 %1061
    %v1065 = vmul.f32 %v1023, %v1060
    %v1066 = vmul.f32 %v1024, %v1062
    %v1069 = vrot.slane %v1065, 3
    %v1070 = vrot.slane %v1066, 2
    %v1071 = vsel %vm329, %v1070, %v1069
    %1072 = vrot.lane.b32.xlu0 %v1071, 110
    %v1073 = vpop.permute.xlu0 %1072
    %v1074 = vsel %vm148, %v1073, 0
    %1076 = vmatprep.subr.mxu0 0.0
    %1077 = vmatpush1.msra.mxu0 %v336
    %1078 = vmatprep.subr.mxu0 0.0
    %1079 = vmatpush1.msra.mxu0 0.0
    %1080 = vmatprep.subr.mxu0 0.0
    %1081 = vmatpush1.msra.mxu0 0.0
    %1082 = vmatprep.subr.mxu0 0.0
    %1083 = vmatpush1.msra.mxu0 0.0
    %1084 = vmatprep.subr.mxu0 0.0
    %1085 = vmatpush1.msra.mxu0 0.0
    %1086 = vmatprep.subr.mxu0 0.0
    %1087 = vmatpush1.msra.mxu0 0.0
    %1088 = vmatprep.subr.mxu0 0.0
    %1089 = vmatpush1.msra.mxu0 0.0
    %1090 = vmatprep.subr.mxu0 0.0
    %1091 = vmatpush1.msra.mxu0 0.0
    %1092 = vmatprep.subr.mxu0 0.0
    %1093 = vmatpush1.msra.mxu0 0.0
    %1094 = vmatprep.subr.mxu0 0.0
    %1095 = vmatpush1.msra.mxu0 0.0
    %1096 = vmatprep.subr.mxu0 0.0
    %1097 = vmatpush1.msra.mxu0 0.0
    %1098 = vmatprep.subr.mxu0 0.0
    %1099 = vmatpush1.msra.mxu0 0.0
    %1100 = vmatprep.subr.mxu0 0.0
    %1101 = vmatpush1.msra.mxu0 0.0
    %1102 = vmatprep.subr.mxu0 0.0
    %1103 = vmatpush1.msra.mxu0 0.0
    %1104 = vmatprep.subr.mxu0 0.0
    %1105 = vmatpush1.msra.mxu0 0.0
    %1106 = vmatprep.subr.mxu0 0.0
    %1107 = vmatpush1.msra.mxu0 0.0
    %1108 = vmatprep.subr.mxu0 0.0
    %1109 = vmatpush1.msra.mxu0 0.0
    %1110 = vmatprep.subr.mxu0 0.0
    %1111 = vmatpush1.msra.mxu0 0.0
    %1112 = vmatprep.subr.mxu0 0.0
    %1113 = vmatpush1.msra.mxu0 0.0
    %1114 = vmatprep.subr.mxu0 0.0
    %1115 = vmatpush1.msra.mxu0 0.0
    %1116 = vmatprep.subr.mxu0 0.0
    %1117 = vmatpush1.msra.mxu0 0.0
    %1118 = vmatprep.subr.mxu0 0.0
    %1119 = vmatpush1.msra.mxu0 0.0
    %1120 = vmatprep.subr.mxu0 0.0
    %1121 = vmatpush1.msra.mxu0 0.0
    %1122 = vmatprep.subr.mxu0 0.0
    %1123 = vmatpush1.msra.mxu0 0.0
    %1124 = vmatprep.subr.mxu0 0.0
    %1125 = vmatpush1.msra.mxu0 0.0
    %1126 = vmatprep.subr.mxu0 0.0
    %1127 = vmatpush1.msra.mxu0 0.0
    %1128 = vmatprep.subr.mxu0 0.0
    %1129 = vmatpush1.msra.mxu0 0.0
    %1130 = vmatprep.subr.mxu0 0.0
    %1131 = vmatpush1.msra.mxu0 0.0
    %1132 = vmatprep.subr.mxu0 0.0
    %1133 = vmatpush1.msra.mxu0 0.0
    %1134 = vmatprep.subr.mxu0 0.0
    %1135 = vmatpush1.msra.mxu0 0.0
    %1136 = vmatprep.subr.mxu0 0.0
    %1137 = vmatpush1.msra.mxu0 0.0
    %1138 = vmatprep.subr.mxu0 0.0
    %1139 = vmatpush1.msra.mxu0 0.0
    %1140 = vmatprep.mubr.f32.mxu0 0.0
    %1141 = vmatmul.mubr.f32.gmra.mrb[0].mxu0 %v1074
    %v1142 = vpop.f32.mrb[0].mxu0
    %v1143 = vadd.f32 %v324, %v1142
    %v1144 = vpop.f32.mrb[0].mxu0
    %1145 = vdwg.mxu0
    %v1148 = vunpack.c.l.s4 1966171168
    %v1149 = vunpack.c.0.s8 %v1148
    %v1150 = vlaneseq
    %v1151 = vshrl.u32 %v1150, 7
    %v1152 = vsub.s32 %v1149, %v1151
    %v1153 = vrot.slane %v1143, %v1152
    %v1154 = vcombine.high %v1153, %v1153
    %v1156 = vunpack.c.l.s4 1966171168
    %v1157 = vunpack.c.0.s8 %v1156
    %v1158 = vlaneseq
    %v1159 = vshrl.u32 %v1158, 7
    %v1160 = vsub.s32 %v1157, %v1159
    %v1161 = vrot.slane %v1153, %v1160
    %v1163 = vunpack.c.l.s4 1966171168
    %v1164 = vunpack.c.0.s8 %v1163
    %v1165 = vlaneseq
    %v1166 = vshrl.u32 %v1165, 7
    %v1167 = vsub.s32 %v1164, %v1166
    %v1168 = vrot.slane %v1154, %v1167
    %1171 = vst.msk [vmem:[#allocation5 + $0x3] sm:$0x1] %vm433, %v1161
    %1172 = vst.msk [vmem:[#allocation5 + $0xb] sm:$0x1] %vm433, %v1168
    %1173 = vset.pattern.permute.xlu0 18
    %1174 = vperm.xlu0 %1173, %v1065
    %v1175 = vpop.permute.xlu0 %1174
    %1177 = vset.pattern.permute.xlu0 18
    %1178 = vperm.xlu0 %1177, %v1066
    %v1179 = vpop.permute.xlu0 %1178
    %v1181 = vmul.f32 %v1175, %v240
    %v1182 = vmul.f32 %v1179, %v240
    %1183 = vset.pattern.permute.xlu0 19
    %1184 = vperm.xlu0 %1183, %v1065
    %v1185 = vpop.permute.xlu0 %1184
    %1187 = vset.pattern.permute.xlu0 19
    %1188 = vperm.xlu0 %1187, %v1066
    %v1189 = vpop.permute.xlu0 %1188
    %v1191 = vmul.f32 %v1185, %v245
    %v1192 = vmul.f32 %v1189, %v245
    %1193 = vset.pattern.permute.xlu0 20
    %1194 = vperm.xlu0 %1193, %v1065
    %v1195 = vpop.permute.xlu0 %1194
    %1197 = vset.pattern.permute.xlu0 20
    %1198 = vperm.xlu0 %1197, %v1066
    %v1199 = vpop.permute.xlu0 %1198
    %v1201 = vmul.f32 %v1195, %v250
    %v1202 = vmul.f32 %v1199, %v250
    %1203 = vset.pattern.permute.xlu0 21
    %1204 = vperm.xlu0 %1203, %v1065
    %v1205 = vpop.permute.xlu0 %1204
    %1207 = vset.pattern.permute.xlu0 21
    %1208 = vperm.xlu0 %1207, %v1066
    %v1209 = vpop.permute.xlu0 %1208
    %v1211 = vmul.f32 %v1205, %v255
    %v1212 = vmul.f32 %v1209, %v255
    %1213 = vset.pattern.permute.xlu0 22
    %1214 = vperm.xlu0 %1213, %v1065
    %v1215 = vpop.permute.xlu0 %1214
    %1217 = vset.pattern.permute.xlu0 22
    %1218 = vperm.xlu0 %1217, %v1066
    %v1219 = vpop.permute.xlu0 %1218
    %v1221 = vmul.f32 %v1215, %v260
    %v1222 = vmul.f32 %v1219, %v260
    %1223 = vset.pattern.permute.xlu0 23
    %1224 = vperm.xlu0 %1223, %v1065
    %v1225 = vpop.permute.xlu0 %1224
    %1227 = vset.pattern.permute.xlu0 23
    %1228 = vperm.xlu0 %1227, %v1066
    %v1229 = vpop.permute.xlu0 %1228
    %v1231 = vmul.f32 %v1225, %v265
    %v1232 = vmul.f32 %v1229, %v265
    %v1235 = vrot.slane %v1181, 7
    %v1236 = vrot.slane %v1182, 7
    %v1239 = vadd.f32 %v226, %v1235
    %v1240 = vadd.f32 %v231, %v1236
    %v1241 = vadd.f32 %v1191, %v1201
    %v1242 = vadd.f32 %v1192, %v1202
    %v1243 = vadd.f32 %v1211, %v1221
    %v1244 = vadd.f32 %v1212, %v1222
    %v1247 = vrot.slane %v1241, 7
    %v1248 = vrot.slane %v1242, 7
    %v1251 = vadd.f32 %v1239, %v1247
    %v1252 = vadd.f32 %v1240, %v1248
    %v1253 = vadd.f32 %v1243, %v1231
    %v1254 = vadd.f32 %v1244, %v1232
    %v1257 = vrot.slane %v1253, 7
    %v1258 = vrot.slane %v1254, 7
    %v1261 = vadd.f32 %v1251, %v1257
    %v1262 = vadd.f32 %v1252, %v1258
    %v1263 = vmul.f32 %v1261, 0.5
    %v1264 = vmul.f32 %v1262, 0.5
    %v1265 = vtanh.pop %v1263
    %v1266 = vtanh.pop %v1264
    %v1267 = vmul.f32 %v1265, 0.5
    %v1268 = vmul.f32 %v1266, 0.5
    %v1269 = vadd.f32 %v1267, 0.5
    %v1270 = vadd.f32 %v1268, 0.5
    %v1271 = vtanh.pop %v1261
    %v1272 = vtanh.pop %v1262
    %v1275 = vrot.slane %v1053, 7
    %v1276 = vrot.slane %v1054, 7
    %v1279 = vmul.f32 %v1269, %v1275
    %v1280 = vmul.f32 %v1270, %v1276
    %1283 = vrot.lane.b32.xlu0 %v1271, 116
    %v1284 = vpop.permute.xlu0 %1283
    %1285 = vrot.lane.b32.xlu0 %v1272, 116
    %v1286 = vpop.permute.xlu0 %1285
    %v1289 = vmul.f32 %v1269, %v1284
    %v1290 = vmul.f32 %v1270, %v1286
    %1293 = vrot.lane.b32.xlu0 %v1289, 6
    %v1294 = vpop.permute.xlu0 %1293
    %1295 = vrot.lane.b32.xlu0 %v1290, 6
    %v1296 = vpop.permute.xlu0 %1295
    %v1299 = vadd.f32 %v1279, %v1294
    %v1300 = vadd.f32 %v1280, %v1296
    %v1301 = vtanh.pop %v1299
    %v1302 = vtanh.pop %v1300
    %1305 = vrot.lane.b32.xlu0 %v1301, 12
    %v1306 = vpop.permute.xlu0 %1305
    %1307 = vrot.lane.b32.xlu0 %v1302, 12
    %v1308 = vpop.permute.xlu0 %1307
    %v1311 = vmul.f32 %v1269, %v1306
    %v1312 = vmul.f32 %v1270, %v1308
    %v1315 = vrot.slane %v1311, 4
    %v1316 = vrot.slane %v1312, 3
    %v1317 = vsel %vm329, %v1316, %v1315
    %1318 = vrot.lane.b32.xlu0 %v1317, 110
    %v1319 = vpop.permute.xlu0 %1318
    %v1320 = vsel %vm148, %v1319, 0
    %1322 = vmatprep.subr.mxu0 0.0
    %1323 = vmatpush1.msra.mxu0 %v336
    %1324 = vmatprep.subr.mxu0 0.0
    %1325 = vmatpush1.msra.mxu0 0.0
    %1326 = vmatprep.subr.mxu0 0.0
    %1327 = vmatpush1.msra.mxu0 0.0
    %1328 = vmatprep.subr.mxu0 0.0
    %1329 = vmatpush1.msra.mxu0 0.0
    %1330 = vmatprep.subr.mxu0 0.0
    %1331 = vmatpush1.msra.mxu0 0.0
    %1332 = vmatprep.subr.mxu0 0.0
    %1333 = vmatpush1.msra.mxu0 0.0
    %1334 = vmatprep.subr.mxu0 0.0
    %1335 = vmatpush1.msra.mxu0 0.0
    %1336 = vmatprep.subr.mxu0 0.0
    %1337 = vmatpush1.msra.mxu0 0.0
    %1338 = vmatprep.subr.mxu0 0.0
    %1339 = vmatpush1.msra.mxu0 0.0
    %1340 = vmatprep.subr.mxu0 0.0
    %1341 = vmatpush1.msra.mxu0 0.0
    %1342 = vmatprep.subr.mxu0 0.0
    %1343 = vmatpush1.msra.mxu0 0.0
    %1344 = vmatprep.subr.mxu0 0.0
    %1345 = vmatpush1.msra.mxu0 0.0
    %1346 = vmatprep.subr.mxu0 0.0
    %1347 = vmatpush1.msra.mxu0 0.0
    %1348 = vmatprep.subr.mxu0 0.0
    %1349 = vmatpush1.msra.mxu0 0.0
    %1350 = vmatprep.subr.mxu0 0.0
    %1351 = vmatpush1.msra.mxu0 0.0
    %1352 = vmatprep.subr.mxu0 0.0
    %1353 = vmatpush1.msra.mxu0 0.0
    %1354 = vmatprep.subr.mxu0 0.0
    %1355 = vmatpush1.msra.mxu0 0.0
    %1356 = vmatprep.subr.mxu0 0.0
    %1357 = vmatpush1.msra.mxu0 0.0
    %1358 = vmatprep.subr.mxu0 0.0
    %1359 = vmatpush1.msra.mxu0 0.0
    %1360 = vmatprep.subr.mxu0 0.0
    %1361 = vmatpush1.msra.mxu0 0.0
    %1362 = vmatprep.subr.mxu0 0.0
    %1363 = vmatpush1.msra.mxu0 0.0
    %1364 = vmatprep.subr.mxu0 0.0
    %1365 = vmatpush1.msra.mxu0 0.0
    %1366 = vmatprep.subr.mxu0 0.0
    %1367 = vmatpush1.msra.mxu0 0.0
    %1368 = vmatprep.subr.mxu0 0.0
    %1369 = vmatpush1.msra.mxu0 0.0
    %1370 = vmatprep.subr.mxu0 0.0
    %1371 = vmatpush1.msra.mxu0 0.0
    %1372 = vmatprep.subr.mxu0 0.0
    %1373 = vmatpush1.msra.mxu0 0.0
    %1374 = vmatprep.subr.mxu0 0.0
    %1375 = vmatpush1.msra.mxu0 0.0
    %1376 = vmatprep.subr.mxu0 0.0
    %1377 = vmatpush1.msra.mxu0 0.0
    %1378 = vmatprep.subr.mxu0 0.0
    %1379 = vmatpush1.msra.mxu0 0.0
    %1380 = vmatprep.subr.mxu0 0.0
    %1381 = vmatpush1.msra.mxu0 0.0
    %1382 = vmatprep.subr.mxu0 0.0
    %1383 = vmatpush1.msra.mxu0 0.0
    %1384 = vmatprep.subr.mxu0 0.0
    %1385 = vmatpush1.msra.mxu0 0.0
    %1386 = vmatprep.mubr.f32.mxu0 0.0
    %1387 = vmatmul.mubr.f32.gmra.mrb[0].mxu0 %v1320
    %v1388 = vpop.f32.mrb[0].mxu0
    %v1389 = vadd.f32 %v324, %v1388
    %v1390 = vpop.f32.mrb[0].mxu0
    %1391 = vdwg.mxu0
    %v1394 = vunpack.c.l.s4 1966171168
    %v1395 = vunpack.c.0.s8 %v1394
    %v1396 = vlaneseq
    %v1397 = vshrl.u32 %v1396, 7
    %v1398 = vsub.s32 %v1395, %v1397
    %v1399 = vrot.slane %v1389, %v1398
    %v1400 = vcombine.high %v1399, %v1399
    %v1402 = vunpack.c.l.s4 1966171168
    %v1403 = vunpack.c.0.s8 %v1402
    %v1404 = vlaneseq
    %v1405 = vshrl.u32 %v1404, 7
    %v1406 = vsub.s32 %v1403, %v1405
    %v1407 = vrot.slane %v1399, %v1406
    %v1409 = vunpack.c.l.s4 1966171168
    %v1410 = vunpack.c.0.s8 %v1409
    %v1411 = vlaneseq
    %v1412 = vshrl.u32 %v1411, 7
    %v1413 = vsub.s32 %v1410, %v1412
    %v1414 = vrot.slane %v1400, %v1413
    %1417 = vst.msk [vmem:[#allocation5 + $0x4] sm:$0x1] %vm433, %v1407
    %1418 = vst.msk [vmem:[#allocation5 + $0xc] sm:$0x1] %vm433, %v1414
    %1419 = vset.pattern.permute.xlu0 18
    %1420 = vperm.xlu0 %1419, %v1311
    %v1421 = vpop.permute.xlu0 %1420
    %1423 = vset.pattern.permute.xlu0 18
    %1424 = vperm.xlu0 %1423, %v1312
    %v1425 = vpop.permute.xlu0 %1424
    %v1427 = vmul.f32 %v1421, %v240
    %v1428 = vmul.f32 %v1425, %v240
    %1429 = vset.pattern.permute.xlu0 19
    %1430 = vperm.xlu0 %1429, %v1311
    %v1431 = vpop.permute.xlu0 %1430
    %1433 = vset.pattern.permute.xlu0 19
    %1434 = vperm.xlu0 %1433, %v1312
    %v1435 = vpop.permute.xlu0 %1434
    %v1437 = vmul.f32 %v1431, %v245
    %v1438 = vmul.f32 %v1435, %v245
    %1439 = vset.pattern.permute.xlu0 20
    %1440 = vperm.xlu0 %1439, %v1311
    %v1441 = vpop.permute.xlu0 %1440
    %1443 = vset.pattern.permute.xlu0 20
    %1444 = vperm.xlu0 %1443, %v1312
    %v1445 = vpop.permute.xlu0 %1444
    %v1447 = vmul.f32 %v1441, %v250
    %v1448 = vmul.f32 %v1445, %v250
    %1449 = vset.pattern.permute.xlu0 21
    %1450 = vperm.xlu0 %1449, %v1311
    %v1451 = vpop.permute.xlu0 %1450
    %1453 = vset.pattern.permute.xlu0 21
    %1454 = vperm.xlu0 %1453, %v1312
    %v1455 = vpop.permute.xlu0 %1454
    %v1457 = vmul.f32 %v1451, %v255
    %v1458 = vmul.f32 %v1455, %v255
    %1459 = vset.pattern.permute.xlu0 22
    %1460 = vperm.xlu0 %1459, %v1311
    %v1461 = vpop.permute.xlu0 %1460
    %1463 = vset.pattern.permute.xlu0 22
    %1464 = vperm.xlu0 %1463, %v1312
    %v1465 = vpop.permute.xlu0 %1464
    %v1467 = vmul.f32 %v1461, %v260
    %v1468 = vmul.f32 %v1465, %v260
    %1469 = vset.pattern.permute.xlu0 23
    %1470 = vperm.xlu0 %1469, %v1311
    %v1471 = vpop.permute.xlu0 %1470
    %1473 = vset.pattern.permute.xlu0 23
    %1474 = vperm.xlu0 %1473, %v1312
    %v1475 = vpop.permute.xlu0 %1474
    %v1477 = vmul.f32 %v1471, %v265
    %v1478 = vmul.f32 %v1475, %v265
    %v1481 = vrot.slane %v1427, 7
    %v1482 = vrot.slane %v1428, 7
    %v1485 = vadd.f32 %v226, %v1481
    %v1486 = vadd.f32 %v231, %v1482
    %v1487 = vadd.f32 %v1437, %v1447
    %v1488 = vadd.f32 %v1438, %v1448
    %v1489 = vadd.f32 %v1457, %v1467
    %v1490 = vadd.f32 %v1458, %v1468
    %v1493 = vrot.slane %v1487, 7
    %v1494 = vrot.slane %v1488, 7
    %v1497 = vadd.f32 %v1485, %v1493
    %v1498 = vadd.f32 %v1486, %v1494
    %v1499 = vadd.f32 %v1489, %v1477
    %v1500 = vadd.f32 %v1490, %v1478
    %v1503 = vrot.slane %v1499, 7
    %v1504 = vrot.slane %v1500, 7
    %v1507 = vadd.f32 %v1497, %v1503
    %v1508 = vadd.f32 %v1498, %v1504
    %v1509 = vmul.f32 %v1507, 0.5
    %v1510 = vmul.f32 %v1508, 0.5
    %v1511 = vtanh.pop %v1509
    %v1512 = vtanh.pop %v1510
    %v1513 = vmul.f32 %v1511, 0.5
    %v1514 = vmul.f32 %v1512, 0.5
    %v1515 = vadd.f32 %v1513, 0.5
    %v1516 = vadd.f32 %v1514, 0.5
    %v1517 = vtanh.pop %v1507
    %v1518 = vtanh.pop %v1508
    %v1521 = vrot.slane %v1299, 7
    %v1522 = vrot.slane %v1300, 7
    %v1525 = vmul.f32 %v1515, %v1521
    %v1526 = vmul.f32 %v1516, %v1522
    %1529 = vrot.lane.b32.xlu0 %v1517, 116
    %v1530 = vpop.permute.xlu0 %1529
    %1531 = vrot.lane.b32.xlu0 %v1518, 116
    %v1532 = vpop.permute.xlu0 %1531
    %v1535 = vmul.f32 %v1515, %v1530
    %v1536 = vmul.f32 %v1516, %v1532
    %1539 = vrot.lane.b32.xlu0 %v1535, 6
    %v1540 = vpop.permute.xlu0 %1539
    %1541 = vrot.lane.b32.xlu0 %v1536, 6
    %v1542 = vpop.permute.xlu0 %1541
    %v1545 = vadd.f32 %v1525, %v1540
    %v1546 = vadd.f32 %v1526, %v1542
    %v1547 = vtanh.pop %v1545
    %v1548 = vtanh.pop %v1546
    %1551 = vrot.lane.b32.xlu0 %v1547, 12
    %v1552 = vpop.permute.xlu0 %1551
    %1553 = vrot.lane.b32.xlu0 %v1548, 12
    %v1554 = vpop.permute.xlu0 %1553
    %v1557 = vmul.f32 %v1515, %v1552
    %v1558 = vmul.f32 %v1516, %v1554
    %v1561 = vrot.slane %v1557, 5
    %v1562 = vrot.slane %v1558, 4
    %v1563 = vsel %vm329, %v1562, %v1561
    %1564 = vrot.lane.b32.xlu0 %v1563, 110
    %v1565 = vpop.permute.xlu0 %1564
    %v1566 = vsel %vm148, %v1565, 0
    %1568 = vmatprep.subr.mxu0 0.0
    %1569 = vmatpush1.msra.mxu0 %v336
    %1570 = vmatprep.subr.mxu0 0.0
    %1571 = vmatpush1.msra.mxu0 0.0
    %1572 = vmatprep.subr.mxu0 0.0
    %1573 = vmatpush1.msra.mxu0 0.0
    %1574 = vmatprep.subr.mxu0 0.0
    %1575 = vmatpush1.msra.mxu0 0.0
    %1576 = vmatprep.subr.mxu0 0.0
    %1577 = vmatpush1.msra.mxu0 0.0
    %1578 = vmatprep.subr.mxu0 0.0
    %1579 = vmatpush1.msra.mxu0 0.0
    %1580 = vmatprep.subr.mxu0 0.0
    %1581 = vmatpush1.msra.mxu0 0.0
    %1582 = vmatprep.subr.mxu0 0.0
    %1583 = vmatpush1.msra.mxu0 0.0
    %1584 = vmatprep.subr.mxu0 0.0
    %1585 = vmatpush1.msra.mxu0 0.0
    %1586 = vmatprep.subr.mxu0 0.0
    %1587 = vmatpush1.msra.mxu0 0.0
    %1588 = vmatprep.subr.mxu0 0.0
    %1589 = vmatpush1.msra.mxu0 0.0
    %1590 = vmatprep.subr.mxu0 0.0
    %1591 = vmatpush1.msra.mxu0 0.0
    %1592 = vmatprep.subr.mxu0 0.0
    %1593 = vmatpush1.msra.mxu0 0.0
    %1594 = vmatprep.subr.mxu0 0.0
    %1595 = vmatpush1.msra.mxu0 0.0
    %1596 = vmatprep.subr.mxu0 0.0
    %1597 = vmatpush1.msra.mxu0 0.0
    %1598 = vmatprep.subr.mxu0 0.0
    %1599 = vmatpush1.msra.mxu0 0.0
    %1600 = vmatprep.subr.mxu0 0.0
    %1601 = vmatpush1.msra.mxu0 0.0
    %1602 = vmatprep.subr.mxu0 0.0
    %1603 = vmatpush1.msra.mxu0 0.0
    %1604 = vmatprep.subr.mxu0 0.0
    %1605 = vmatpush1.msra.mxu0 0.0
    %1606 = vmatprep.subr.mxu0 0.0
    %1607 = vmatpush1.msra.mxu0 0.0
    %1608 = vmatprep.subr.mxu0 0.0
    %1609 = vmatpush1.msra.mxu0 0.0
    %1610 = vmatprep.subr.mxu0 0.0
    %1611 = vmatpush1.msra.mxu0 0.0
    %1612 = vmatprep.subr.mxu0 0.0
    %1613 = vmatpush1.msra.mxu0 0.0
    %1614 = vmatprep.subr.mxu0 0.0
    %1615 = vmatpush1.msra.mxu0 0.0
    %1616 = vmatprep.subr.mxu0 0.0
    %1617 = vmatpush1.msra.mxu0 0.0
    %1618 = vmatprep.subr.mxu0 0.0
    %1619 = vmatpush1.msra.mxu0 0.0
    %1620 = vmatprep.subr.mxu0 0.0
    %1621 = vmatpush1.msra.mxu0 0.0
    %1622 = vmatprep.subr.mxu0 0.0
    %1623 = vmatpush1.msra.mxu0 0.0
    %1624 = vmatprep.subr.mxu0 0.0
    %1625 = vmatpush1.msra.mxu0 0.0
    %1626 = vmatprep.subr.mxu0 0.0
    %1627 = vmatpush1.msra.mxu0 0.0
    %1628 = vmatprep.subr.mxu0 0.0
    %1629 = vmatpush1.msra.mxu0 0.0
    %1630 = vmatprep.subr.mxu0 0.0
    %1631 = vmatpush1.msra.mxu0 0.0
    %1632 = vmatprep.mubr.f32.mxu0 0.0
    %1633 = vmatmul.mubr.f32.gmra.mrb[0].mxu0 %v1566
    %v1634 = vpop.f32.mrb[0].mxu0
    %v1635 = vadd.f32 %v324, %v1634
    %v1636 = vpop.f32.mrb[0].mxu0
    %1637 = vdwg.mxu0
    %v1640 = vunpack.c.l.s4 1966171168
    %v1641 = vunpack.c.0.s8 %v1640
    %v1642 = vlaneseq
    %v1643 = vshrl.u32 %v1642, 7
    %v1644 = vsub.s32 %v1641, %v1643
    %v1645 = vrot.slane %v1635, %v1644
    %v1646 = vcombine.high %v1645, %v1645
    %v1648 = vunpack.c.l.s4 1966171168
    %v1649 = vunpack.c.0.s8 %v1648
    %v1650 = vlaneseq
    %v1651 = vshrl.u32 %v1650, 7
    %v1652 = vsub.s32 %v1649, %v1651
    %v1653 = vrot.slane %v1645, %v1652
    %v1655 = vunpack.c.l.s4 1966171168
    %v1656 = vunpack.c.0.s8 %v1655
    %v1657 = vlaneseq
    %v1658 = vshrl.u32 %v1657, 7
    %v1659 = vsub.s32 %v1656, %v1658
    %v1660 = vrot.slane %v1646, %v1659
    %1663 = vst.msk [vmem:[#allocation5 + $0x5] sm:$0x1] %vm433, %v1653
    %1664 = vst.msk [vmem:[#allocation5 + $0xd] sm:$0x1] %vm433, %v1660
    %1665 = vset.pattern.permute.xlu0 18
    %1666 = vperm.xlu0 %1665, %v1557
    %v1667 = vpop.permute.xlu0 %1666
    %1669 = vset.pattern.permute.xlu0 18
    %1670 = vperm.xlu0 %1669, %v1558
    %v1671 = vpop.permute.xlu0 %1670
    %v1673 = vmul.f32 %v1667, %v240
    %v1674 = vmul.f32 %v1671, %v240
    %1675 = vset.pattern.permute.xlu0 19
    %1676 = vperm.xlu0 %1675, %v1557
    %v1677 = vpop.permute.xlu0 %1676
    %1679 = vset.pattern.permute.xlu0 19
    %1680 = vperm.xlu0 %1679, %v1558
    %v1681 = vpop.permute.xlu0 %1680
    %v1683 = vmul.f32 %v1677, %v245
    %v1684 = vmul.f32 %v1681, %v245
    %1685 = vset.pattern.permute.xlu0 20
    %1686 = vperm.xlu0 %1685, %v1557
    %v1687 = vpop.permute.xlu0 %1686
    %1689 = vset.pattern.permute.xlu0 20
    %1690 = vperm.xlu0 %1689, %v1558
    %v1691 = vpop.permute.xlu0 %1690
    %v1693 = vmul.f32 %v1687, %v250
    %v1694 = vmul.f32 %v1691, %v250
    %1695 = vset.pattern.permute.xlu0 21
    %1696 = vperm.xlu0 %1695, %v1557
    %v1697 = vpop.permute.xlu0 %1696
    %1699 = vset.pattern.permute.xlu0 21
    %1700 = vperm.xlu0 %1699, %v1558
    %v1701 = vpop.permute.xlu0 %1700
    %v1703 = vmul.f32 %v1697, %v255
    %v1704 = vmul.f32 %v1701, %v255
    %1705 = vset.pattern.permute.xlu0 22
    %1706 = vperm.xlu0 %1705, %v1557
    %v1707 = vpop.permute.xlu0 %1706
    %1709 = vset.pattern.permute.xlu0 22
    %1710 = vperm.xlu0 %1709, %v1558
    %v1711 = vpop.permute.xlu0 %1710
    %v1713 = vmul.f32 %v1707, %v260
    %v1714 = vmul.f32 %v1711, %v260
    %1715 = vset.pattern.permute.xlu0 23
    %1716 = vperm.xlu0 %1715, %v1557
    %v1717 = vpop.permute.xlu0 %1716
    %1719 = vset.pattern.permute.xlu0 23
    %1720 = vperm.xlu0 %1719, %v1558
    %v1721 = vpop.permute.xlu0 %1720
    %v1723 = vmul.f32 %v1717, %v265
    %v1724 = vmul.f32 %v1721, %v265
    %v1727 = vrot.slane %v1673, 7
    %v1728 = vrot.slane %v1674, 7
    %v1731 = vadd.f32 %v226, %v1727
    %v1732 = vadd.f32 %v231, %v1728
    %v1733 = vadd.f32 %v1683, %v1693
    %v1734 = vadd.f32 %v1684, %v1694
    %v1735 = vadd.f32 %v1703, %v1713
    %v1736 = vadd.f32 %v1704, %v1714
    %v1739 = vrot.slane %v1733, 7
    %v1740 = vrot.slane %v1734, 7
    %v1743 = vadd.f32 %v1731, %v1739
    %v1744 = vadd.f32 %v1732, %v1740
    %v1745 = vadd.f32 %v1735, %v1723
    %v1746 = vadd.f32 %v1736, %v1724
    %v1749 = vrot.slane %v1745, 7
    %v1750 = vrot.slane %v1746, 7
    %v1753 = vadd.f32 %v1743, %v1749
    %v1754 = vadd.f32 %v1744, %v1750
    %v1755 = vmul.f32 %v1753, 0.5
    %v1756 = vmul.f32 %v1754, 0.5
    %v1757 = vtanh.pop %v1755
    %v1758 = vtanh.pop %v1756
    %v1759 = vmul.f32 %v1757, 0.5
    %v1760 = vmul.f32 %v1758, 0.5
    %v1761 = vadd.f32 %v1759, 0.5
    %v1762 = vadd.f32 %v1760, 0.5
    %v1763 = vtanh.pop %v1753
    %v1764 = vtanh.pop %v1754
    %v1767 = vrot.slane %v1545, 7
    %v1768 = vrot.slane %v1546, 7
    %v1771 = vmul.f32 %v1761, %v1767
    %v1772 = vmul.f32 %v1762, %v1768
    %1775 = vrot.lane.b32.xlu0 %v1763, 116
    %v1776 = vpop.permute.xlu0 %1775
    %1777 = vrot.lane.b32.xlu0 %v1764, 116
    %v1778 = vpop.permute.xlu0 %1777
    %v1781 = vmul.f32 %v1761, %v1776
    %v1782 = vmul.f32 %v1762, %v1778
    %1785 = vrot.lane.b32.xlu0 %v1781, 6
    %v1786 = vpop.permute.xlu0 %1785
    %1787 = vrot.lane.b32.xlu0 %v1782, 6
    %v1788 = vpop.permute.xlu0 %1787
    %v1791 = vadd.f32 %v1771, %v1786
    %v1792 = vadd.f32 %v1772, %v1788
    %v1793 = vtanh.pop %v1791
    %v1794 = vtanh.pop %v1792
    %1797 = vrot.lane.b32.xlu0 %v1793, 12
    %v1798 = vpop.permute.xlu0 %1797
    %1799 = vrot.lane.b32.xlu0 %v1794, 12
    %v1800 = vpop.permute.xlu0 %1799
    %v1803 = vmul.f32 %v1761, %v1798
    %v1804 = vmul.f32 %v1762, %v1800
    %v1807 = vrot.slane %v1803, 6
    %v1808 = vrot.slane %v1804, 5
    %v1809 = vsel %vm329, %v1808, %v1807
    %1810 = vrot.lane.b32.xlu0 %v1809, 110
    %v1811 = vpop.permute.xlu0 %1810
    %v1812 = vsel %vm148, %v1811, 0
    %1814 = vmatprep.subr.mxu0 0.0
    %1815 = vmatpush1.msra.mxu0 %v336
    %1816 = vmatprep.subr.mxu0 0.0
    %1817 = vmatpush1.msra.mxu0 0.0
    %1818 = vmatprep.subr.mxu0 0.0
    %1819 = vmatpush1.msra.mxu0 0.0
    %1820 = vmatprep.subr.mxu0 0.0
    %1821 = vmatpush1.msra.mxu0 0.0
    %1822 = vmatprep.subr.mxu0 0.0
    %1823 = vmatpush1.msra.mxu0 0.0
    %1824 = vmatprep.subr.mxu0 0.0
    %1825 = vmatpush1.msra.mxu0 0.0
    %1826 = vmatprep.subr.mxu0 0.0
    %1827 = vmatpush1.msra.mxu0 0.0
    %1828 = vmatprep.subr.mxu0 0.0
    %1829 = vmatpush1.msra.mxu0 0.0
    %1830 = vmatprep.subr.mxu0 0.0
    %1831 = vmatpush1.msra.mxu0 0.0
    %1832 = vmatprep.subr.mxu0 0.0
    %1833 = vmatpush1.msra.mxu0 0.0
    %1834 = vmatprep.subr.mxu0 0.0
    %1835 = vmatpush1.msra.mxu0 0.0
    %1836 = vmatprep.subr.mxu0 0.0
    %1837 = vmatpush1.msra.mxu0 0.0
    %1838 = vmatprep.subr.mxu0 0.0
    %1839 = vmatpush1.msra.mxu0 0.0
    %1840 = vmatprep.subr.mxu0 0.0
    %1841 = vmatpush1.msra.mxu0 0.0
    %1842 = vmatprep.subr.mxu0 0.0
    %1843 = vmatpush1.msra.mxu0 0.0
    %1844 = vmatprep.subr.mxu0 0.0
    %1845 = vmatpush1.msra.mxu0 0.0
    %1846 = vmatprep.subr.mxu0 0.0
    %1847 = vmatpush1.msra.mxu0 0.0
    %1848 = vmatprep.subr.mxu0 0.0
    %1849 = vmatpush1.msra.mxu0 0.0
    %1850 = vmatprep.subr.mxu0 0.0
    %1851 = vmatpush1.msra.mxu0 0.0
    %1852 = vmatprep.subr.mxu0 0.0
    %1853 = vmatpush1.msra.mxu0 0.0
    %1854 = vmatprep.subr.mxu0 0.0
    %1855 = vmatpush1.msra.mxu0 0.0
    %1856 = vmatprep.subr.mxu0 0.0
    %1857 = vmatpush1.msra.mxu0 0.0
    %1858 = vmatprep.subr.mxu0 0.0
    %1859 = vmatpush1.msra.mxu0 0.0
    %1860 = vmatprep.subr.mxu0 0.0
    %1861 = vmatpush1.msra.mxu0 0.0
    %1862 = vmatprep.subr.mxu0 0.0
    %1863 = vmatpush1.msra.mxu0 0.0
    %1864 = vmatprep.subr.mxu0 0.0
    %1865 = vmatpush1.msra.mxu0 0.0
    %1866 = vmatprep.subr.mxu0 0.0
    %1867 = vmatpush1.msra.mxu0 0.0
    %1868 = vmatprep.subr.mxu0 0.0
    %1869 = vmatpush1.msra.mxu0 0.0
    %1870 = vmatprep.subr.mxu0 0.0
    %1871 = vmatpush1.msra.mxu0 0.0
    %1872 = vmatprep.subr.mxu0 0.0
    %1873 = vmatpush1.msra.mxu0 0.0
    %1874 = vmatprep.subr.mxu0 0.0
    %1875 = vmatpush1.msra.mxu0 0.0
    %1876 = vmatprep.subr.mxu0 0.0
    %1877 = vmatpush1.msra.mxu0 0.0
    %1878 = vmatprep.mubr.f32.mxu0 0.0
    %1879 = vmatmul.mubr.f32.gmra.mrb[0].mxu0 %v1812
    %v1880 = vpop.f32.mrb[0].mxu0
    %v1881 = vadd.f32 %v324, %v1880
    %v1882 = vpop.f32.mrb[0].mxu0
    %1883 = vdwg.mxu0
    %v1886 = vunpack.c.l.s4 1966171168
    %v1887 = vunpack.c.0.s8 %v1886
    %v1888 = vlaneseq
    %v1889 = vshrl.u32 %v1888, 7
    %v1890 = vsub.s32 %v1887, %v1889
    %v1891 = vrot.slane %v1881, %v1890
    %v1892 = vcombine.high %v1891, %v1891
    %v1894 = vunpack.c.l.s4 1966171168
    %v1895 = vunpack.c.0.s8 %v1894
    %v1896 = vlaneseq
    %v1897 = vshrl.u32 %v1896, 7
    %v1898 = vsub.s32 %v1895, %v1897
    %v1899 = vrot.slane %v1891, %v1898
    %v1901 = vunpack.c.l.s4 1966171168
    %v1902 = vunpack.c.0.s8 %v1901
    %v1903 = vlaneseq
    %v1904 = vshrl.u32 %v1903, 7
    %v1905 = vsub.s32 %v1902, %v1904
    %v1906 = vrot.slane %v1892, %v1905
    %1909 = vst.msk [vmem:[#allocation5 + $0x6] sm:$0x1] %vm433, %v1899
    %1910 = vst.msk [vmem:[#allocation5 + $0xe] sm:$0x1] %vm433, %v1906
    %1911 = vset.pattern.permute.xlu0 18
    %1912 = vperm.xlu0 %1911, %v1803
    %v1913 = vpop.permute.xlu0 %1912
    %1915 = vset.pattern.permute.xlu0 18
    %1916 = vperm.xlu0 %1915, %v1804
    %v1917 = vpop.permute.xlu0 %1916
    %v1919 = vmul.f32 %v1913, %v240
    %v1920 = vmul.f32 %v1917, %v240
    %1921 = vset.pattern.permute.xlu0 19
    %1922 = vperm.xlu0 %1921, %v1803
    %v1923 = vpop.permute.xlu0 %1922
    %1925 = vset.pattern.permute.xlu0 19
    %1926 = vperm.xlu0 %1925, %v1804
    %v1927 = vpop.permute.xlu0 %1926
    %v1929 = vmul.f32 %v1923, %v245
    %v1930 = vmul.f32 %v1927, %v245
    %1931 = vset.pattern.permute.xlu0 20
    %1932 = vperm.xlu0 %1931, %v1803
    %v1933 = vpop.permute.xlu0 %1932
    %1935 = vset.pattern.permute.xlu0 20
    %1936 = vperm.xlu0 %1935, %v1804
    %v1937 = vpop.permute.xlu0 %1936
    %v1939 = vmul.f32 %v1933, %v250
    %v1940 = vmul.f32 %v1937, %v250
    %1941 = vset.pattern.permute.xlu0 21
    %1942 = vperm.xlu0 %1941, %v1803
    %v1943 = vpop.permute.xlu0 %1942
    %1945 = vset.pattern.permute.xlu0 21
    %1946 = vperm.xlu0 %1945, %v1804
    %v1947 = vpop.permute.xlu0 %1946
    %v1949 = vmul.f32 %v1943, %v255
    %v1950 = vmul.f32 %v1947, %v255
    %1951 = vset.pattern.permute.xlu0 22
    %1952 = vperm.xlu0 %1951, %v1803
    %v1953 = vpop.permute.xlu0 %1952
    %1955 = vset.pattern.permute.xlu0 22
    %1956 = vperm.xlu0 %1955, %v1804
    %v1957 = vpop.permute.xlu0 %1956
    %v1959 = vmul.f32 %v1953, %v260
    %v1960 = vmul.f32 %v1957, %v260
    %1961 = vset.pattern.permute.xlu0 23
    %1962 = vperm.xlu0 %1961, %v1803
    %v1963 = vpop.permute.xlu0 %1962
    %1965 = vset.pattern.permute.xlu0 23
    %1966 = vperm.xlu0 %1965, %v1804
    %v1967 = vpop.permute.xlu0 %1966
    %v1969 = vmul.f32 %v1963, %v265
    %v1970 = vmul.f32 %v1967, %v265
    %v1973 = vrot.slane %v1919, 7
    %v1974 = vrot.slane %v1920, 7
    %v1977 = vadd.f32 %v226, %v1973
    %v1978 = vadd.f32 %v231, %v1974
    %v1979 = vadd.f32 %v1929, %v1939
    %v1980 = vadd.f32 %v1930, %v1940
    %v1981 = vadd.f32 %v1949, %v1959
    %v1982 = vadd.f32 %v1950, %v1960
    %v1985 = vrot.slane %v1979, 7
    %v1986 = vrot.slane %v1980, 7
    %v1989 = vadd.f32 %v1977, %v1985
    %v1990 = vadd.f32 %v1978, %v1986
    %v1991 = vadd.f32 %v1981, %v1969
    %v1992 = vadd.f32 %v1982, %v1970
    %v1995 = vrot.slane %v1991, 7
    %v1996 = vrot.slane %v1992, 7
    %v1999 = vadd.f32 %v1989, %v1995
    %v2000 = vadd.f32 %v1990, %v1996
    %v2001 = vmul.f32 %v1999, 0.5
    %v2002 = vmul.f32 %v2000, 0.5
    %v2003 = vtanh.pop %v2001
    %v2004 = vtanh.pop %v2002
    %v2005 = vmul.f32 %v2003, 0.5
    %v2006 = vmul.f32 %v2004, 0.5
    %v2007 = vadd.f32 %v2005, 0.5
    %v2008 = vadd.f32 %v2006, 0.5
    %v2009 = vtanh.pop %v1999
    %v2010 = vtanh.pop %v2000
    %v2013 = vrot.slane %v1791, 7
    %v2014 = vrot.slane %v1792, 7
    %v2017 = vmul.f32 %v2007, %v2013
    %v2018 = vmul.f32 %v2008, %v2014
    %2021 = vrot.lane.b32.xlu0 %v2009, 116
    %v2022 = vpop.permute.xlu0 %2021
    %2023 = vrot.lane.b32.xlu0 %v2010, 116
    %v2024 = vpop.permute.xlu0 %2023
    %v2027 = vmul.f32 %v2007, %v2022
    %v2028 = vmul.f32 %v2008, %v2024
    %2031 = vrot.lane.b32.xlu0 %v2027, 6
    %v2032 = vpop.permute.xlu0 %2031
    %2033 = vrot.lane.b32.xlu0 %v2028, 6
    %v2034 = vpop.permute.xlu0 %2033
    %v2037 = vadd.f32 %v2017, %v2032
    %v2038 = vadd.f32 %v2018, %v2034
    %v2039 = vtanh.pop %v2037
    %v2040 = vtanh.pop %v2038
    %2043 = vrot.lane.b32.xlu0 %v2039, 12
    %v2044 = vpop.permute.xlu0 %2043
    %2045 = vrot.lane.b32.xlu0 %v2040, 12
    %v2046 = vpop.permute.xlu0 %2045
    %v2049 = vmul.f32 %v2007, %v2044
    %v2050 = vmul.f32 %v2008, %v2046
    %v2053 = vrot.slane %v2049, 7
    %v2054 = vrot.slane %v2050, 6
    %v2055 = vsel %vm329, %v2054, %v2053
    %2056 = vrot.lane.b32.xlu0 %v2055, 110
    %v2057 = vpop.permute.xlu0 %2056
    %v2058 = vsel %vm148, %v2057, 0
    %2060 = vmatprep.subr.mxu0 0.0
    %2061 = vmatpush1.msra.mxu0 %v336
    %2062 = vmatprep.subr.mxu0 0.0
    %2063 = vmatpush1.msra.mxu0 0.0
    %2064 = vmatprep.subr.mxu0 0.0
    %2065 = vmatpush1.msra.mxu0 0.0
    %2066 = vmatprep.subr.mxu0 0.0
    %2067 = vmatpush1.msra.mxu0 0.0
    %2068 = vmatprep.subr.mxu0 0.0
    %2069 = vmatpush1.msra.mxu0 0.0
    %2070 = vmatprep.subr.mxu0 0.0
    %2071 = vmatpush1.msra.mxu0 0.0
    %2072 = vmatprep.subr.mxu0 0.0
    %2073 = vmatpush1.msra.mxu0 0.0
    %2074 = vmatprep.subr.mxu0 0.0
    %2075 = vmatpush1.msra.mxu0 0.0
    %2076 = vmatprep.subr.mxu0 0.0
    %2077 = vmatpush1.msra.mxu0 0.0
    %2078 = vmatprep.subr.mxu0 0.0
    %2079 = vmatpush1.msra.mxu0 0.0
    %2080 = vmatprep.subr.mxu0 0.0
    %2081 = vmatpush1.msra.mxu0 0.0
    %2082 = vmatprep.subr.mxu0 0.0
    %2083 = vmatpush1.msra.mxu0 0.0
    %2084 = vmatprep.subr.mxu0 0.0
    %2085 = vmatpush1.msra.mxu0 0.0
    %2086 = vmatprep.subr.mxu0 0.0
    %2087 = vmatpush1.msra.mxu0 0.0
    %2088 = vmatprep.subr.mxu0 0.0
    %2089 = vmatpush1.msra.mxu0 0.0
    %2090 = vmatprep.subr.mxu0 0.0
    %2091 = vmatpush1.msra.mxu0 0.0
    %2092 = vmatprep.subr.mxu0 0.0
    %2093 = vmatpush1.msra.mxu0 0.0
    %2094 = vmatprep.subr.mxu0 0.0
    %2095 = vmatpush1.msra.mxu0 0.0
    %2096 = vmatprep.subr.mxu0 0.0
    %2097 = vmatpush1.msra.mxu0 0.0
    %2098 = vmatprep.subr.mxu0 0.0
    %2099 = vmatpush1.msra.mxu0 0.0
    %2100 = vmatprep.subr.mxu0 0.0
    %2101 = vmatpush1.msra.mxu0 0.0
    %2102 = vmatprep.subr.mxu0 0.0
    %2103 = vmatpush1.msra.mxu0 0.0
    %2104 = vmatprep.subr.mxu0 0.0
    %2105 = vmatpush1.msra.mxu0 0.0
    %2106 = vmatprep.subr.mxu0 0.0
    %2107 = vmatpush1.msra.mxu0 0.0
    %2108 = vmatprep.subr.mxu0 0.0
    %2109 = vmatpush1.msra.mxu0 0.0
    %2110 = vmatprep.subr.mxu0 0.0
    %2111 = vmatpush1.msra.mxu0 0.0
    %2112 = vmatprep.subr.mxu0 0.0
    %2113 = vmatpush1.msra.mxu0 0.0
    %2114 = vmatprep.subr.mxu0 0.0
    %2115 = vmatpush1.msra.mxu0 0.0
    %2116 = vmatprep.subr.mxu0 0.0
    %2117 = vmatpush1.msra.mxu0 0.0
    %2118 = vmatprep.subr.mxu0 0.0
    %2119 = vmatpush1.msra.mxu0 0.0
    %2120 = vmatprep.subr.mxu0 0.0
    %2121 = vmatpush1.msra.mxu0 0.0
    %2122 = vmatprep.subr.mxu0 0.0
    %2123 = vmatpush1.msra.mxu0 0.0
    %2124 = vmatprep.mubr.f32.mxu0 0.0
    %2125 = vmatmul.mubr.f32.gmra.mrb[0].mxu0 %v2058
    %v2126 = vpop.f32.mrb[0].mxu0
    %v2127 = vadd.f32 %v324, %v2126
    %v2128 = vpop.f32.mrb[0].mxu0
    %2129 = vdwg.mxu0
    %v2132 = vunpack.c.l.s4 1966171168
    %v2133 = vunpack.c.0.s8 %v2132
    %v2134 = vlaneseq
    %v2135 = vshrl.u32 %v2134, 7
    %v2136 = vsub.s32 %v2133, %v2135
    %v2137 = vrot.slane %v2127, %v2136
    %v2138 = vcombine.high %v2137, %v2137
    %v2140 = vunpack.c.l.s4 1966171168
    %v2141 = vunpack.c.0.s8 %v2140
    %v2142 = vlaneseq
    %v2143 = vshrl.u32 %v2142, 7
    %v2144 = vsub.s32 %v2141, %v2143
    %v2145 = vrot.slane %v2137, %v2144
    %v2147 = vunpack.c.l.s4 1966171168
    %v2148 = vunpack.c.0.s8 %v2147
    %v2149 = vlaneseq
    %v2150 = vshrl.u32 %v2149, 7
    %v2151 = vsub.s32 %v2148, %v2150
    %v2152 = vrot.slane %v2138, %v2151
    %2155 = vst.msk [vmem:[#allocation5 + $0x7] sm:$0x1] %vm433, %v2145
    %2156 = vst.msk [vmem:[#allocation5 + $0xf] sm:$0x1] %vm433, %v2152
    // Predicated region
    $region38: #{toy_lstm_forward.1} parent=1 // pred_check
      _
    $region39: #{toy_lstm_forward.1} parent=1 // pred_check_branch
      %2158 = sbr.rel (0) target = $region41
    $region40: #{toy_lstm_forward.1} parent=1 // pred_region
      %s2160 = ssub.s32 256, 256
      %2161 = vsyncadd [#allocation4], %s2160
      %s2162 = sshll.u32 [#allocation5], 4
      %s2163 = int_to_ptr.vmem [resolvable:$true] %s2162
      %2168 = dma.vmem_to_hbm [thread:$0]  %s2163, 256, %s8, [#allocation4], 128, 128, 8
    $region41: #{toy_lstm_forward.1} parent=1 // pred_fallthru
      _
    // Predicated region
    $region42: #{toy_lstm_forward.1} parent=1 // pred_check
      _
    $region43: #{toy_lstm_forward.1} parent=1 // pred_check_branch
      %2170 = sbr.rel (0) target = $region45
    $region44: #{toy_lstm_forward.1} parent=1 // pred_region
      %2171 = dma.done [#allocation4], 256
    $region45: #{toy_lstm_forward.1} parent=1 // pred_fallthru
      _
    %2172 = vsyncpa [#allocation3], 1
    %2173 = vsyncpa [#allocation4], 1

</llo_original>
